<compile_context>
chip_gen: v7x
topology: tpu7x:2x2x1
jax: 0.10.0
libtpu: 0.0.40
codegen_flags: <defaults>
</compile_context>

<pallas_src>
import functools

import jax
import jax.numpy as jnp
from jax.experimental import pallas as pl
from jax.experimental.pallas import tpu as pltpu


CFG = dict(
    vocab_size=128, max_pos=16, type_vocab=2,
    hidden=32, num_layers=2, num_heads=2, head_dim=16,
    intermediate=64, num_classes=3, ln_eps=1e-12,
)


# ------------------------------ fused kernel --------------------------------


def _bert_forward_kernel(
    emb_ref, mask_ref,
    emb_g_ref, emb_b_ref,
    wqkv_ref, bqkv_ref, wo_ref, bo_ref, ln1_g_ref, ln1_b_ref,
    w1_ref, b1_ref, w2_ref, b2_ref, ln2_g_ref, ln2_b_ref,
    pool_w_ref, pool_b_ref, cls_w_ref, clsb_ref,
    logits_ref,
    *, num_layers, B, S, nH, D, eps):

    H = nH * D

    def layernorm(x, g, b):
        mean = jnp.mean(x, axis=-1, keepdims=True)
        var = jnp.mean(jnp.square(x - mean), axis=-1, keepdims=True)
        return (x - mean) * jax.lax.rsqrt(var + eps) * g + b

    def dense(x_bf, w, b):
        # bf16 MXU operands, f32 accumulation, f32 bias add.
        return jnp.dot(x_bf, w, preferred_element_type=jnp.float32) + b

    # --- embedding LayerNorm ---
    h = layernorm(emb_ref[...], emb_g_ref[...], emb_b_ref[...])          # [M, H] f32
    add_mask = mask_ref[...]                                              # [M, S] f32 (pre-broadcast)

    for l in range(num_layers):
        # --- fused QKV projection: one lane-dense [M, 3H] matmul ---
        h_bf = h.astype(jnp.bfloat16)                                     # cast once per layer
        qkv = dense(h_bf, wqkv_ref[l], bqkv_ref[l])                       # [M, 3H] f32
        qkv_bf = qkv.astype(jnp.bfloat16)                                 # cast once, slice many

        # --- attention on sublane-aligned 2-D slices (S == f32 sublane tile);
        #     context kept entirely in vregs, no VMEM scratch round trip ---
        ctx_rows = []
        for bi in range(B):
            r0 = bi * S
            mask_b = add_mask[r0:r0 + S, :]                               # [S, S]
            heads = []
            for hh in range(nH):
                q = qkv_bf[r0:r0 + S, hh * D:(hh + 1) * D]                # [S, D]
                k = qkv_bf[r0:r0 + S, H + hh * D:H + (hh + 1) * D]        # [S, D]
                v = qkv_bf[r0:r0 + S, 2 * H + hh * D:2 * H + (hh + 1) * D]
                # 1/sqrt(D) is pre-folded into the Q block of wqkv (init time).
                s = jnp.einsum("qd,kd->qk", q, k,
                               preferred_element_type=jnp.float32)        # [S, S]
                s = s + mask_b
                s = s - jnp.max(s, axis=-1, keepdims=True)
                p = jnp.exp(s)
                p = p * pl.reciprocal(jnp.sum(p, axis=-1, keepdims=True),
                                      approx=True)
                heads.append(jnp.dot(p.astype(jnp.bfloat16), v,
                                     preferred_element_type=jnp.float32)) # [S, D]
            ctx_rows.append(jnp.concatenate(heads, axis=-1))              # [S, H]
        ctx = jnp.concatenate(ctx_rows, axis=0)                           # [M, H], in vregs

        # --- output projection + residual + LayerNorm (fused, stays in VMEM) ---
        attn_out = dense(ctx.astype(jnp.bfloat16), wo_ref[l], bo_ref[l])  # [M, H]
        h = layernorm(attn_out + h, ln1_g_ref[l], ln1_b_ref[l])

        # --- FFN up-proj + GELU, down-proj + residual + LayerNorm (fused) ---
        inter = dense(h.astype(jnp.bfloat16), w1_ref[l], b1_ref[l])       # [M, I]
        # TODO(synk): HF/PyTorch BERT default is exact erf-GELU; tanh approximation used here.
        inter = jax.nn.gelu(inter, approximate=True)
        ffn = dense(inter.astype(jnp.bfloat16), w2_ref[l], b2_ref[l])     # [M, H]
        h = layernorm(ffn + h, ln2_g_ref[l], ln2_b_ref[l])

    # --- batched pooler (tanh on [CLS]) + classifier: 2 matmuls, 1 store ---
    cls_rows = jnp.concatenate([h[bi * S:bi * S + 1, :] for bi in range(B)],
                               axis=0)                                    # [B, H]
    pooled = jnp.tanh(dense(cls_rows.astype(jnp.bfloat16),
                            pool_w_ref[...], pool_b_ref[...]))            # [B, H]
    # dropout: identity at inference (eval mode)
    logits = dense(pooled.astype(jnp.bfloat16), cls_w_ref[...], clsb_ref[...])
    logits_ref[...] = logits.astype(logits_ref.dtype)                     # one store


# --------------------------- params + forward glue ---------------------------


def init_params(key, cfg):
    H, I, L = cfg["hidden"], cfg["intermediate"], cfg["num_layers"]
    C = cfg["num_classes"]
    D = cfg["head_dim"]
    bf = jnp.bfloat16

    def nrm(k, shape, dtype=jnp.float32):
        return (0.02 * jax.random.normal(k, shape, jnp.float32)).astype(dtype)

    keys = iter(jax.random.split(key, 32))

    # nn.Linear weights stored transposed ([in, out]); matmul weights in bf16.
    # The 1/sqrt(head_dim) attention scale is folded into the Q block of wqkv
    # here (one-time init cost, removed from the kernel).  The Q bias block is
    # zero, so it needs no scaling.
    wqkv = 0.02 * jax.random.normal(next(keys), (L, H, 3 * H), jnp.float32)
    wqkv = wqkv.at[:, :, :H].multiply(1.0 / (D ** 0.5))

    return dict(
        word_emb=nrm(next(keys), (cfg["vocab_size"], H)),
        pos_emb=nrm(next(keys), (cfg["max_pos"], H)),
        type_emb=nrm(next(keys), (cfg["type_vocab"], H)),
        emb_ln_g=jnp.ones((1, H), jnp.float32),
        emb_ln_b=jnp.zeros((1, H), jnp.float32),
        wqkv=wqkv.astype(bf),
        bqkv=jnp.zeros((L, 1, 3 * H), jnp.float32),
        wo=nrm(next(keys), (L, H, H), bf),
        bo=jnp.zeros((L, 1, H), jnp.float32),
        ln1_g=jnp.ones((L, 1, H), jnp.float32),
        ln1_b=jnp.zeros((L, 1, H), jnp.float32),
        w1=nrm(next(keys), (L, H, I), bf),
        b1=jnp.zeros((L, 1, I), jnp.float32),
        w2=nrm(next(keys), (L, I, H), bf),
        b2=jnp.zeros((L, 1, H), jnp.float32),
        ln2_g=jnp.ones((L, 1, H), jnp.float32),
        ln2_b=jnp.zeros((L, 1, H), jnp.float32),
        pool_w=nrm(next(keys), (H, H), bf),
        pool_b=jnp.zeros((1, H), jnp.float32),
        cls_w=nrm(next(keys), (H, C), bf),
        cls_b=jnp.zeros((1, C), jnp.float32),
    )


def bert_classifier_forward(params, input_ids, attention_mask, cfg=CFG):
    B, S = input_ids.shape
    H, nH, D = cfg["hidden"], cfg["num_heads"], cfg["head_dim"]
    C = cfg["num_classes"]
    M = B * S

    # --- embeddings (gather glue, plain JAX); LN happens inside the kernel ---
    pos_ids = jnp.arange(S)
    emb = (jnp.take(params["word_emb"], input_ids, axis=0)
           + params["pos_emb"][pos_ids][None, :, :]
           + params["type_emb"][0][None, None, :])        # token_type_ids == 0
    emb = emb.reshape(M, H).astype(jnp.float32)

    # additive attention mask pre-broadcast ONCE to [M, S]
    # (-1e9 at padded key positions, same key row repeated for every query row)
    ext = (1.0 - attention_mask.astype(jnp.float32)) * -1e9             # [B, S]
    add_mask = jnp.broadcast_to(ext[:, None, :], (B, S, S)).reshape(M, S)

    kernel = functools.partial(
        _bert_forward_kernel,
        num_layers=cfg["num_layers"], B=B, S=S, nH=nH, D=D, eps=cfg["ln_eps"])

    vmem = pl.BlockSpec(memory_space=pltpu.MemorySpace.VMEM)
    inputs = (emb, add_mask,
              params["emb_ln_g"], params["emb_ln_b"],
              params["wqkv"], params["bqkv"], params["wo"], params["bo"],
              params["ln1_g"], params["ln1_b"],
              params["w1"], params["b1"], params["w2"], params["b2"],
              params["ln2_g"], params["ln2_b"],
              params["pool_w"], params["pool_b"],
              params["cls_w"], params["cls_b"])

    return pl.pallas_call(
        kernel,
        out_shape=jax.ShapeDtypeStruct((B, C), jnp.float32),
        in_specs=[vmem] * len(inputs),
        out_specs=vmem,
    )(*inputs)


# ----------------------------------- main -----------------------------------

if __name__ == "__main__":
    key = jax.random.PRNGKey(0)
    pkey, ikey = jax.random.split(key)

    params = init_params(pkey, CFG)

    B, S = 2, 8
    input_ids = jax.random.randint(ikey, (B, S), 0, CFG["vocab_size"], dtype=jnp.int32)
    # second sequence has its last 2 tokens masked out
    attention_mask = jnp.array(
        [[1, 1, 1, 1, 1, 1, 1, 1],
         [1, 1, 1, 1, 1, 1, 0, 0]], dtype=jnp.int32)

    fwd = jax.jit(bert_classifier_forward)
    logits = jax.block_until_ready(fwd(params, input_ids, attention_mask))

    assert logits.shape == (B, CFG["num_classes"])
    assert bool(jnp.all(jnp.isfinite(logits)))
    print("KERNEL_OK")
</pallas_src>

<mosaic_0001>
module attributes {stable_mosaic.version = 11 : i64} {
  func.func @_bert_forward_kernel(%arg0: memref<16x32xf32, #tpu.memory_space<vmem>>, %arg1: memref<16x8xf32, #tpu.memory_space<vmem>>, %arg2: memref<1x32xf32, #tpu.memory_space<vmem>>, %arg3: memref<1x32xf32, #tpu.memory_space<vmem>>, %arg4: memref<2x32x96xbf16, #tpu.memory_space<vmem>>, %arg5: memref<2x1x96xf32, #tpu.memory_space<vmem>>, %arg6: memref<2x32x32xbf16, #tpu.memory_space<vmem>>, %arg7: memref<2x1x32xf32, #tpu.memory_space<vmem>>, %arg8: memref<2x1x32xf32, #tpu.memory_space<vmem>>, %arg9: memref<2x1x32xf32, #tpu.memory_space<vmem>>, %arg10: memref<2x32x64xbf16, #tpu.memory_space<vmem>>, %arg11: memref<2x1x64xf32, #tpu.memory_space<vmem>>, %arg12: memref<2x64x32xbf16, #tpu.memory_space<vmem>>, %arg13: memref<2x1x32xf32, #tpu.memory_space<vmem>>, %arg14: memref<2x1x32xf32, #tpu.memory_space<vmem>>, %arg15: memref<2x1x32xf32, #tpu.memory_space<vmem>>, %arg16: memref<32x32xbf16, #tpu.memory_space<vmem>>, %arg17: memref<1x32xf32, #tpu.memory_space<vmem>>, %arg18: memref<32x3xbf16, #tpu.memory_space<vmem>>, %arg19: memref<1x3xf32, #tpu.memory_space<vmem>>, %arg20: memref<2x3xf32, #tpu.memory_space<vmem>>) attributes {dimension_semantics = [], scalar_prefetch = 0 : i64, scratch_operands = 0 : i64, tpu.core_type = #tpu.core_type<tc>} {
    %c0 = arith.constant 0 : index
    %c0_0 = arith.constant 0 : index
    %0 = vector.load %arg0[%c0, %c0_0] : memref<16x32xf32, #tpu.memory_space<vmem>>, vector<16x32xf32>
    %c0_1 = arith.constant 0 : index
    %c0_2 = arith.constant 0 : index
    %1 = vector.load %arg2[%c0_1, %c0_2] : memref<1x32xf32, #tpu.memory_space<vmem>>, vector<1x32xf32>
    %c0_3 = arith.constant 0 : index
    %c0_4 = arith.constant 0 : index
    %2 = vector.load %arg3[%c0_3, %c0_4] : memref<1x32xf32, #tpu.memory_space<vmem>>, vector<1x32xf32>
    %cst = arith.constant dense<0.000000e+00> : vector<16xf32>
    %3 = vector.multi_reduction <add>, %0, %cst [1] : vector<16x32xf32> to vector<16xf32>
    %4 = vector.shape_cast %3 : vector<16xf32> to vector<16x1xf32>
    %cst_5 = arith.constant 3.200000e+01 : f32
    %5 = vector.broadcast %cst_5 : f32 to vector<16x1xf32>
    %6 = arith.divf %4, %5 : vector<16x1xf32>
    %7 = vector.broadcast %6 : vector<16x1xf32> to vector<16x32xf32>
    %8 = arith.subf %0, %7 : vector<16x32xf32>
    %9 = arith.mulf %8, %8 : vector<16x32xf32>
    %cst_6 = arith.constant dense<0.000000e+00> : vector<16xf32>
    %10 = vector.multi_reduction <add>, %9, %cst_6 [1] : vector<16x32xf32> to vector<16xf32>
    %11 = vector.shape_cast %10 : vector<16xf32> to vector<16x1xf32>
    %cst_7 = arith.constant 3.200000e+01 : f32
    %12 = vector.broadcast %cst_7 : f32 to vector<16x1xf32>
    %13 = arith.divf %11, %12 : vector<16x1xf32>
    %14 = vector.broadcast %6 : vector<16x1xf32> to vector<16x32xf32>
    %15 = arith.subf %0, %14 : vector<16x32xf32>
    %cst_8 = arith.constant 9.99999996E-13 : f32
    %16 = vector.broadcast %cst_8 : f32 to vector<16x1xf32>
    %17 = arith.addf %13, %16 : vector<16x1xf32>
    %18 = math.rsqrt %17 : vector<16x1xf32>
    %19 = vector.broadcast %18 : vector<16x1xf32> to vector<16x32xf32>
    %20 = arith.mulf %15, %19 : vector<16x32xf32>
    %21 = vector.broadcast %1 : vector<1x32xf32> to vector<16x32xf32>
    %22 = arith.mulf %20, %21 : vector<16x32xf32>
    %23 = vector.broadcast %2 : vector<1x32xf32> to vector<16x32xf32>
    %24 = arith.addf %22, %23 : vector<16x32xf32>
    %c0_9 = arith.constant 0 : index
    %c0_10 = arith.constant 0 : index
    %25 = vector.load %arg1[%c0_9, %c0_10] : memref<16x8xf32, #tpu.memory_space<vmem>>, vector<16x8xf32>
    %26 = arith.truncf %24 : vector<16x32xf32> to vector<16x32xbf16>
    %c0_11 = arith.constant 0 : index
    %c0_12 = arith.constant 0 : index
    %c0_13 = arith.constant 0 : index
    %27 = vector.load %arg4[%c0_11, %c0_12, %c0_13] : memref<2x32x96xbf16, #tpu.memory_space<vmem>>, vector<1x32x96xbf16>
    %28 = vector.shape_cast %27 : vector<1x32x96xbf16> to vector<32x96xbf16>
    %c0_14 = arith.constant 0 : index
    %c0_15 = arith.constant 0 : index
    %c0_16 = arith.constant 0 : index
    %29 = vector.load %arg5[%c0_14, %c0_15, %c0_16] : memref<2x1x96xf32, #tpu.memory_space<vmem>>, vector<1x1x96xf32>
    %30 = vector.shape_cast %29 : vector<1x1x96xf32> to vector<1x96xf32>
    %cst_17 = arith.constant dense<0.000000e+00> : vector<16x96xf32>
    %31 = tpu.matmul %26, %28, %cst_17 {dimension_numbers = #tpu.dot_dimension_numbers<[1], [0], [0], [1], [0, 0, 1, 1], [], []>} : vector<16x32xbf16>, vector<32x96xbf16>, vector<16x96xf32> -> vector<16x96xf32>
    %32 = vector.broadcast %30 : vector<1x96xf32> to vector<16x96xf32>
    %33 = arith.addf %31, %32 : vector<16x96xf32>
    %34 = arith.truncf %33 : vector<16x96xf32> to vector<16x96xbf16>
    %35 = vector.extract_strided_slice %25 {offsets = [0, 0], sizes = [8, 8], strides = [1, 1]} : vector<16x8xf32> to vector<8x8xf32>
    %36 = vector.extract_strided_slice %34 {offsets = [0, 0], sizes = [8, 16], strides = [1, 1]} : vector<16x96xbf16> to vector<8x16xbf16>
    %37 = vector.extract_strided_slice %34 {offsets = [0, 32], sizes = [8, 16], strides = [1, 1]} : vector<16x96xbf16> to vector<8x16xbf16>
    %38 = vector.extract_strided_slice %34 {offsets = [0, 64], sizes = [8, 16], strides = [1, 1]} : vector<16x96xbf16> to vector<8x16xbf16>
    "tpu.trace_start"() <{level = 10 : i32, message = "qd,kd->qk"}> : () -> ()
    %cst_18 = arith.constant dense<0.000000e+00> : vector<8x8xf32>
    %39 = tpu.matmul %36, %37, %cst_18 {dimension_numbers = #tpu.dot_dimension_numbers<[1], [1], [0], [0], [0, 0, 1, 0], [], []>} : vector<8x16xbf16>, vector<8x16xbf16>, vector<8x8xf32> -> vector<8x8xf32>
    "tpu.trace_stop"() : () -> ()
    %40 = arith.addf %39, %35 : vector<8x8xf32>
    %cst_19 = arith.constant dense<0xFF800000> : vector<8xf32>
    %41 = vector.multi_reduction <maximumf>, %40, %cst_19 [1] : vector<8x8xf32> to vector<8xf32>
    %42 = vector.shape_cast %41 : vector<8xf32> to vector<8x1xf32>
    %43 = vector.broadcast %42 : vector<8x1xf32> to vector<8x8xf32>
    %44 = arith.subf %40, %43 : vector<8x8xf32>
    %45 = math.exp %44 : vector<8x8xf32>
    %cst_20 = arith.constant dense<0.000000e+00> : vector<8xf32>
    %46 = vector.multi_reduction <add>, %45, %cst_20 [1] : vector<8x8xf32> to vector<8xf32>
    %47 = vector.shape_cast %46 : vector<8xf32> to vector<8x1xf32>
    %48 = tpu.reciprocal %47 {approx = true} : vector<8x1xf32> -> vector<8x1xf32>
    %49 = vector.broadcast %48 : vector<8x1xf32> to vector<8x8xf32>
    %50 = arith.mulf %45, %49 : vector<8x8xf32>
    %51 = arith.truncf %50 : vector<8x8xf32> to vector<8x8xbf16>
    %cst_21 = arith.constant dense<0.000000e+00> : vector<8x16xf32>
    %52 = tpu.matmul %51, %38, %cst_21 {dimension_numbers = #tpu.dot_dimension_numbers<[1], [0], [0], [1], [0, 0, 1, 1], [], []>} : vector<8x8xbf16>, vector<8x16xbf16>, vector<8x16xf32> -> vector<8x16xf32>
    %53 = vector.extract_strided_slice %34 {offsets = [0, 16], sizes = [8, 16], strides = [1, 1]} : vector<16x96xbf16> to vector<8x16xbf16>
    %54 = vector.extract_strided_slice %34 {offsets = [0, 48], sizes = [8, 16], strides = [1, 1]} : vector<16x96xbf16> to vector<8x16xbf16>
    %55 = vector.extract_strided_slice %34 {offsets = [0, 80], sizes = [8, 16], strides = [1, 1]} : vector<16x96xbf16> to vector<8x16xbf16>
    "tpu.trace_start"() <{level = 10 : i32, message = "qd,kd->qk"}> : () -> ()
    %cst_22 = arith.constant dense<0.000000e+00> : vector<8x8xf32>
    %56 = tpu.matmul %53, %54, %cst_22 {dimension_numbers = #tpu.dot_dimension_numbers<[1], [1], [0], [0], [0, 0, 1, 0], [], []>} : vector<8x16xbf16>, vector<8x16xbf16>, vector<8x8xf32> -> vector<8x8xf32>
    "tpu.trace_stop"() : () -> ()
    %57 = arith.addf %56, %35 : vector<8x8xf32>
    %cst_23 = arith.constant dense<0xFF800000> : vector<8xf32>
    %58 = vector.multi_reduction <maximumf>, %57, %cst_23 [1] : vector<8x8xf32> to vector<8xf32>
    %59 = vector.shape_cast %58 : vector<8xf32> to vector<8x1xf32>
    %60 = vector.broadcast %59 : vector<8x1xf32> to vector<8x8xf32>
    %61 = arith.subf %57, %60 : vector<8x8xf32>
    %62 = math.exp %61 : vector<8x8xf32>
    %cst_24 = arith.constant dense<0.000000e+00> : vector<8xf32>
    %63 = vector.multi_reduction <add>, %62, %cst_24 [1] : vector<8x8xf32> to vector<8xf32>
    %64 = vector.shape_cast %63 : vector<8xf32> to vector<8x1xf32>
    %65 = tpu.reciprocal %64 {approx = true} : vector<8x1xf32> -> vector<8x1xf32>
    %66 = vector.broadcast %65 : vector<8x1xf32> to vector<8x8xf32>
    %67 = arith.mulf %62, %66 : vector<8x8xf32>
    %68 = arith.truncf %67 : vector<8x8xf32> to vector<8x8xbf16>
    %cst_25 = arith.constant dense<0.000000e+00> : vector<8x16xf32>
    %69 = tpu.matmul %68, %55, %cst_25 {dimension_numbers = #tpu.dot_dimension_numbers<[1], [0], [0], [1], [0, 0, 1, 1], [], []>} : vector<8x8xbf16>, vector<8x16xbf16>, vector<8x16xf32> -> vector<8x16xf32>
    %70 = tpu.concatenate %52, %69 in 1 : vector<8x16xf32>, vector<8x16xf32> -> vector<8x32xf32>
    %71 = vector.extract_strided_slice %25 {offsets = [8, 0], sizes = [8, 8], strides = [1, 1]} : vector<16x8xf32> to vector<8x8xf32>
    %72 = vector.extract_strided_slice %34 {offsets = [8, 0], sizes = [8, 16], strides = [1, 1]} : vector<16x96xbf16> to vector<8x16xbf16>
    %73 = vector.extract_strided_slice %34 {offsets = [8, 32], sizes = [8, 16], strides = [1, 1]} : vector<16x96xbf16> to vector<8x16xbf16>
    %74 = vector.extract_strided_slice %34 {offsets = [8, 64], sizes = [8, 16], strides = [1, 1]} : vector<16x96xbf16> to vector<8x16xbf16>
    "tpu.trace_start"() <{level = 10 : i32, message = "qd,kd->qk"}> : () -> ()
    %cst_26 = arith.constant dense<0.000000e+00> : vector<8x8xf32>
    %75 = tpu.matmul %72, %73, %cst_26 {dimension_numbers = #tpu.dot_dimension_numbers<[1], [1], [0], [0], [0, 0, 1, 0], [], []>} : vector<8x16xbf16>, vector<8x16xbf16>, vector<8x8xf32> -> vector<8x8xf32>
    "tpu.trace_stop"() : () -> ()
    %76 = arith.addf %75, %71 : vector<8x8xf32>
    %cst_27 = arith.constant dense<0xFF800000> : vector<8xf32>
    %77 = vector.multi_reduction <maximumf>, %76, %cst_27 [1] : vector<8x8xf32> to vector<8xf32>
    %78 = vector.shape_cast %77 : vector<8xf32> to vector<8x1xf32>
    %79 = vector.broadcast %78 : vector<8x1xf32> to vector<8x8xf32>
    %80 = arith.subf %76, %79 : vector<8x8xf32>
    %81 = math.exp %80 : vector<8x8xf32>
    %cst_28 = arith.constant dense<0.000000e+00> : vector<8xf32>
    %82 = vector.multi_reduction <add>, %81, %cst_28 [1] : vector<8x8xf32> to vector<8xf32>
    %83 = vector.shape_cast %82 : vector<8xf32> to vector<8x1xf32>
    %84 = tpu.reciprocal %83 {approx = true} : vector<8x1xf32> -> vector<8x1xf32>
    %85 = vector.broadcast %84 : vector<8x1xf32> to vector<8x8xf32>
    %86 = arith.mulf %81, %85 : vector<8x8xf32>
    %87 = arith.truncf %86 : vector<8x8xf32> to vector<8x8xbf16>
    %cst_29 = arith.constant dense<0.000000e+00> : vector<8x16xf32>
    %88 = tpu.matmul %87, %74, %cst_29 {dimension_numbers = #tpu.dot_dimension_numbers<[1], [0], [0], [1], [0, 0, 1, 1], [], []>} : vector<8x8xbf16>, vector<8x16xbf16>, vector<8x16xf32> -> vector<8x16xf32>
    %89 = vector.extract_strided_slice %34 {offsets = [8, 16], sizes = [8, 16], strides = [1, 1]} : vector<16x96xbf16> to vector<8x16xbf16>
    %90 = vector.extract_strided_slice %34 {offsets = [8, 48], sizes = [8, 16], strides = [1, 1]} : vector<16x96xbf16> to vector<8x16xbf16>
    %91 = vector.extract_strided_slice %34 {offsets = [8, 80], sizes = [8, 16], strides = [1, 1]} : vector<16x96xbf16> to vector<8x16xbf16>
    "tpu.trace_start"() <{level = 10 : i32, message = "qd,kd->qk"}> : () -> ()
    %cst_30 = arith.constant dense<0.000000e+00> : vector<8x8xf32>
    %92 = tpu.matmul %89, %90, %cst_30 {dimension_numbers = #tpu.dot_dimension_numbers<[1], [1], [0], [0], [0, 0, 1, 0], [], []>} : vector<8x16xbf16>, vector<8x16xbf16>, vector<8x8xf32> -> vector<8x8xf32>
    "tpu.trace_stop"() : () -> ()
    %93 = arith.addf %92, %71 : vector<8x8xf32>
    %cst_31 = arith.constant dense<0xFF800000> : vector<8xf32>
    %94 = vector.multi_reduction <maximumf>, %93, %cst_31 [1] : vector<8x8xf32> to vector<8xf32>
    %95 = vector.shape_cast %94 : vector<8xf32> to vector<8x1xf32>
    %96 = vector.broadcast %95 : vector<8x1xf32> to vector<8x8xf32>
    %97 = arith.subf %93, %96 : vector<8x8xf32>
    %98 = math.exp %97 : vector<8x8xf32>
    %cst_32 = arith.constant dense<0.000000e+00> : vector<8xf32>
    %99 = vector.multi_reduction <add>, %98, %cst_32 [1] : vector<8x8xf32> to vector<8xf32>
    %100 = vector.shape_cast %99 : vector<8xf32> to vector<8x1xf32>
    %101 = tpu.reciprocal %100 {approx = true} : vector<8x1xf32> -> vector<8x1xf32>
    %102 = vector.broadcast %101 : vector<8x1xf32> to vector<8x8xf32>
    %103 = arith.mulf %98, %102 : vector<8x8xf32>
    %104 = arith.truncf %103 : vector<8x8xf32> to vector<8x8xbf16>
    %cst_33 = arith.constant dense<0.000000e+00> : vector<8x16xf32>
    %105 = tpu.matmul %104, %91, %cst_33 {dimension_numbers = #tpu.dot_dimension_numbers<[1], [0], [0], [1], [0, 0, 1, 1], [], []>} : vector<8x8xbf16>, vector<8x16xbf16>, vector<8x16xf32> -> vector<8x16xf32>
    %106 = tpu.concatenate %88, %105 in 1 : vector<8x16xf32>, vector<8x16xf32> -> vector<8x32xf32>
    %107 = tpu.concatenate %70, %106 in 0 : vector<8x32xf32>, vector<8x32xf32> -> vector<16x32xf32>
    %108 = arith.truncf %107 : vector<16x32xf32> to vector<16x32xbf16>
    %c0_34 = arith.constant 0 : index
    %c0_35 = arith.constant 0 : index
    %c0_36 = arith.constant 0 : index
    %109 = vector.load %arg6[%c0_34, %c0_35, %c0_36] : memref<2x32x32xbf16, #tpu.memory_space<vmem>>, vector<1x32x32xbf16>
    %110 = vector.shape_cast %109 : vector<1x32x32xbf16> to vector<32x32xbf16>
    %c0_37 = arith.constant 0 : index
    %c0_38 = arith.constant 0 : index
    %c0_39 = arith.constant 0 : index
    %111 = vector.load %arg7[%c0_37, %c0_38, %c0_39] : memref<2x1x32xf32, #tpu.memory_space<vmem>>, vector<1x1x32xf32>
    %112 = vector.shape_cast %111 : vector<1x1x32xf32> to vector<1x32xf32>
    %cst_40 = arith.constant dense<0.000000e+00> : vector<16x32xf32>
    %113 = tpu.matmul %108, %110, %cst_40 {dimension_numbers = #tpu.dot_dimension_numbers<[1], [0], [0], [1], [0, 0, 1, 1], [], []>} : vector<16x32xbf16>, vector<32x32xbf16>, vector<16x32xf32> -> vector<16x32xf32>
    %114 = vector.broadcast %112 : vector<1x32xf32> to vector<16x32xf32>
    %115 = arith.addf %113, %114 : vector<16x32xf32>
    %116 = arith.addf %115, %24 : vector<16x32xf32>
    %c0_41 = arith.constant 0 : index
    %c0_42 = arith.constant 0 : index
    %c0_43 = arith.constant 0 : index
    %117 = vector.load %arg8[%c0_41, %c0_42, %c0_43] : memref<2x1x32xf32, #tpu.memory_space<vmem>>, vector<1x1x32xf32>
    %118 = vector.shape_cast %117 : vector<1x1x32xf32> to vector<1x32xf32>
    %c0_44 = arith.constant 0 : index
    %c0_45 = arith.constant 0 : index
    %c0_46 = arith.constant 0 : index
    %119 = vector.load %arg9[%c0_44, %c0_45, %c0_46] : memref<2x1x32xf32, #tpu.memory_space<vmem>>, vector<1x1x32xf32>
    %120 = vector.shape_cast %119 : vector<1x1x32xf32> to vector<1x32xf32>
    %cst_47 = arith.constant dense<0.000000e+00> : vector<16xf32>
    %121 = vector.multi_reduction <add>, %116, %cst_47 [1] : vector<16x32xf32> to vector<16xf32>
    %122 = vector.shape_cast %121 : vector<16xf32> to vector<16x1xf32>
    %cst_48 = arith.constant 3.200000e+01 : f32
    %123 = vector.broadcast %cst_48 : f32 to vector<16x1xf32>
    %124 = arith.divf %122, %123 : vector<16x1xf32>
    %125 = vector.broadcast %124 : vector<16x1xf32> to vector<16x32xf32>
    %126 = arith.subf %116, %125 : vector<16x32xf32>
    %127 = arith.mulf %126, %126 : vector<16x32xf32>
    %cst_49 = arith.constant dense<0.000000e+00> : vector<16xf32>
    %128 = vector.multi_reduction <add>, %127, %cst_49 [1] : vector<16x32xf32> to vector<16xf32>
    %129 = vector.shape_cast %128 : vector<16xf32> to vector<16x1xf32>
    %cst_50 = arith.constant 3.200000e+01 : f32
    %130 = vector.broadcast %cst_50 : f32 to vector<16x1xf32>
    %131 = arith.divf %129, %130 : vector<16x1xf32>
    %132 = vector.broadcast %124 : vector<16x1xf32> to vector<16x32xf32>
    %133 = arith.subf %116, %132 : vector<16x32xf32>
    %cst_51 = arith.constant 9.99999996E-13 : f32
    %134 = vector.broadcast %cst_51 : f32 to vector<16x1xf32>
    %135 = arith.addf %131, %134 : vector<16x1xf32>
    %136 = math.rsqrt %135 : vector<16x1xf32>
    %137 = vector.broadcast %136 : vector<16x1xf32> to vector<16x32xf32>
    %138 = arith.mulf %133, %137 : vector<16x32xf32>
    %139 = vector.broadcast %118 : vector<1x32xf32> to vector<16x32xf32>
    %140 = arith.mulf %138, %139 : vector<16x32xf32>
    %141 = vector.broadcast %120 : vector<1x32xf32> to vector<16x32xf32>
    %142 = arith.addf %140, %141 : vector<16x32xf32>
    %143 = arith.truncf %142 : vector<16x32xf32> to vector<16x32xbf16>
    %c0_52 = arith.constant 0 : index
    %c0_53 = arith.constant 0 : index
    %c0_54 = arith.constant 0 : index
    %144 = vector.load %arg10[%c0_52, %c0_53, %c0_54] : memref<2x32x64xbf16, #tpu.memory_space<vmem>>, vector<1x32x64xbf16>
    %145 = vector.shape_cast %144 : vector<1x32x64xbf16> to vector<32x64xbf16>
    %c0_55 = arith.constant 0 : index
    %c0_56 = arith.constant 0 : index
    %c0_57 = arith.constant 0 : index
    %146 = vector.load %arg11[%c0_55, %c0_56, %c0_57] : memref<2x1x64xf32, #tpu.memory_space<vmem>>, vector<1x1x64xf32>
    %147 = vector.shape_cast %146 : vector<1x1x64xf32> to vector<1x64xf32>
    %cst_58 = arith.constant dense<0.000000e+00> : vector<16x64xf32>
    %148 = tpu.matmul %143, %145, %cst_58 {dimension_numbers = #tpu.dot_dimension_numbers<[1], [0], [0], [1], [0, 0, 1, 1], [], []>} : vector<16x32xbf16>, vector<32x64xbf16>, vector<16x64xf32> -> vector<16x64xf32>
    %149 = vector.broadcast %147 : vector<1x64xf32> to vector<16x64xf32>
    %150 = arith.addf %148, %149 : vector<16x64xf32>
    %151 = arith.mulf %150, %150 : vector<16x64xf32>
    %152 = arith.mulf %150, %151 : vector<16x64xf32>
    %cst_59 = arith.constant 4.471500e-02 : f32
    %153 = vector.broadcast %cst_59 : f32 to vector<16x64xf32>
    %154 = arith.mulf %153, %152 : vector<16x64xf32>
    %155 = arith.addf %150, %154 : vector<16x64xf32>
    %cst_60 = arith.constant 0.797884583 : f32
    %156 = vector.broadcast %cst_60 : f32 to vector<16x64xf32>
    %157 = arith.mulf %156, %155 : vector<16x64xf32>
    %158 = math.tanh %157 : vector<16x64xf32>
    %cst_61 = arith.constant 1.000000e+00 : f32
    %159 = vector.broadcast %cst_61 : f32 to vector<16x64xf32>
    %160 = arith.addf %159, %158 : vector<16x64xf32>
    %cst_62 = arith.constant 5.000000e-01 : f32
    %161 = vector.broadcast %cst_62 : f32 to vector<16x64xf32>
    %162 = arith.mulf %161, %160 : vector<16x64xf32>
    %163 = arith.mulf %150, %162 : vector<16x64xf32>
    %164 = arith.truncf %163 : vector<16x64xf32> to vector<16x64xbf16>
    %c0_63 = arith.constant 0 : index
    %c0_64 = arith.constant 0 : index
    %c0_65 = arith.constant 0 : index
    %165 = vector.load %arg12[%c0_63, %c0_64, %c0_65] : memref<2x64x32xbf16, #tpu.memory_space<vmem>>, vector<1x64x32xbf16>
    %166 = vector.shape_cast %165 : vector<1x64x32xbf16> to vector<64x32xbf16>
    %c0_66 = arith.constant 0 : index
    %c0_67 = arith.constant 0 : index
    %c0_68 = arith.constant 0 : index
    %167 = vector.load %arg13[%c0_66, %c0_67, %c0_68] : memref<2x1x32xf32, #tpu.memory_space<vmem>>, vector<1x1x32xf32>
    %168 = vector.shape_cast %167 : vector<1x1x32xf32> to vector<1x32xf32>
    %cst_69 = arith.constant dense<0.000000e+00> : vector<16x32xf32>
    %169 = tpu.matmul %164, %166, %cst_69 {dimension_numbers = #tpu.dot_dimension_numbers<[1], [0], [0], [1], [0, 0, 1, 1], [], []>} : vector<16x64xbf16>, vector<64x32xbf16>, vector<16x32xf32> -> vector<16x32xf32>
    %170 = vector.broadcast %168 : vector<1x32xf32> to vector<16x32xf32>
    %171 = arith.addf %169, %170 : vector<16x32xf32>
    %172 = arith.addf %171, %142 : vector<16x32xf32>
    %c0_70 = arith.constant 0 : index
    %c0_71 = arith.constant 0 : index
    %c0_72 = arith.constant 0 : index
    %173 = vector.load %arg14[%c0_70, %c0_71, %c0_72] : memref<2x1x32xf32, #tpu.memory_space<vmem>>, vector<1x1x32xf32>
    %174 = vector.shape_cast %173 : vector<1x1x32xf32> to vector<1x32xf32>
    %c0_73 = arith.constant 0 : index
    %c0_74 = arith.constant 0 : index
    %c0_75 = arith.constant 0 : index
    %175 = vector.load %arg15[%c0_73, %c0_74, %c0_75] : memref<2x1x32xf32, #tpu.memory_space<vmem>>, vector<1x1x32xf32>
    %176 = vector.shape_cast %175 : vector<1x1x32xf32> to vector<1x32xf32>
    %cst_76 = arith.constant dense<0.000000e+00> : vector<16xf32>
    %177 = vector.multi_reduction <add>, %172, %cst_76 [1] : vector<16x32xf32> to vector<16xf32>
    %178 = vector.shape_cast %177 : vector<16xf32> to vector<16x1xf32>
    %cst_77 = arith.constant 3.200000e+01 : f32
    %179 = vector.broadcast %cst_77 : f32 to vector<16x1xf32>
    %180 = arith.divf %178, %179 : vector<16x1xf32>
    %181 = vector.broadcast %180 : vector<16x1xf32> to vector<16x32xf32>
    %182 = arith.subf %172, %181 : vector<16x32xf32>
    %183 = arith.mulf %182, %182 : vector<16x32xf32>
    %cst_78 = arith.constant dense<0.000000e+00> : vector<16xf32>
    %184 = vector.multi_reduction <add>, %183, %cst_78 [1] : vector<16x32xf32> to vector<16xf32>
    %185 = vector.shape_cast %184 : vector<16xf32> to vector<16x1xf32>
    %cst_79 = arith.constant 3.200000e+01 : f32
    %186 = vector.broadcast %cst_79 : f32 to vector<16x1xf32>
    %187 = arith.divf %185, %186 : vector<16x1xf32>
    %188 = vector.broadcast %180 : vector<16x1xf32> to vector<16x32xf32>
    %189 = arith.subf %172, %188 : vector<16x32xf32>
    %cst_80 = arith.constant 9.99999996E-13 : f32
    %190 = vector.broadcast %cst_80 : f32 to vector<16x1xf32>
    %191 = arith.addf %187, %190 : vector<16x1xf32>
    %192 = math.rsqrt %191 : vector<16x1xf32>
    %193 = vector.broadcast %192 : vector<16x1xf32> to vector<16x32xf32>
    %194 = arith.mulf %189, %193 : vector<16x32xf32>
    %195 = vector.broadcast %174 : vector<1x32xf32> to vector<16x32xf32>
    %196 = arith.mulf %194, %195 : vector<16x32xf32>
    %197 = vector.broadcast %176 : vector<1x32xf32> to vector<16x32xf32>
    %198 = arith.addf %196, %197 : vector<16x32xf32>
    %199 = arith.truncf %198 : vector<16x32xf32> to vector<16x32xbf16>
    %c1 = arith.constant 1 : index
    %c0_81 = arith.constant 0 : index
    %c0_82 = arith.constant 0 : index
    %200 = vector.load %arg4[%c1, %c0_81, %c0_82] : memref<2x32x96xbf16, #tpu.memory_space<vmem>>, vector<1x32x96xbf16>
    %201 = vector.shape_cast %200 : vector<1x32x96xbf16> to vector<32x96xbf16>
    %c1_83 = arith.constant 1 : index
    %c0_84 = arith.constant 0 : index
    %c0_85 = arith.constant 0 : index
    %202 = vector.load %arg5[%c1_83, %c0_84, %c0_85] : memref<2x1x96xf32, #tpu.memory_space<vmem>>, vector<1x1x96xf32>
    %203 = vector.shape_cast %202 : vector<1x1x96xf32> to vector<1x96xf32>
    %cst_86 = arith.constant dense<0.000000e+00> : vector<16x96xf32>
    %204 = tpu.matmul %199, %201, %cst_86 {dimension_numbers = #tpu.dot_dimension_numbers<[1], [0], [0], [1], [0, 0, 1, 1], [], []>} : vector<16x32xbf16>, vector<32x96xbf16>, vector<16x96xf32> -> vector<16x96xf32>
    %205 = vector.broadcast %203 : vector<1x96xf32> to vector<16x96xf32>
    %206 = arith.addf %204, %205 : vector<16x96xf32>
    %207 = arith.truncf %206 : vector<16x96xf32> to vector<16x96xbf16>
    %208 = vector.extract_strided_slice %25 {offsets = [0, 0], sizes = [8, 8], strides = [1, 1]} : vector<16x8xf32> to vector<8x8xf32>
    %209 = vector.extract_strided_slice %207 {offsets = [0, 0], sizes = [8, 16], strides = [1, 1]} : vector<16x96xbf16> to vector<8x16xbf16>
    %210 = vector.extract_strided_slice %207 {offsets = [0, 32], sizes = [8, 16], strides = [1, 1]} : vector<16x96xbf16> to vector<8x16xbf16>
    %211 = vector.extract_strided_slice %207 {offsets = [0, 64], sizes = [8, 16], strides = [1, 1]} : vector<16x96xbf16> to vector<8x16xbf16>
    "tpu.trace_start"() <{level = 10 : i32, message = "qd,kd->qk"}> : () -> ()
    %cst_87 = arith.constant dense<0.000000e+00> : vector<8x8xf32>
    %212 = tpu.matmul %209, %210, %cst_87 {dimension_numbers = #tpu.dot_dimension_numbers<[1], [1], [0], [0], [0, 0, 1, 0], [], []>} : vector<8x16xbf16>, vector<8x16xbf16>, vector<8x8xf32> -> vector<8x8xf32>
    "tpu.trace_stop"() : () -> ()
    %213 = arith.addf %212, %208 : vector<8x8xf32>
    %cst_88 = arith.constant dense<0xFF800000> : vector<8xf32>
    %214 = vector.multi_reduction <maximumf>, %213, %cst_88 [1] : vector<8x8xf32> to vector<8xf32>
    %215 = vector.shape_cast %214 : vector<8xf32> to vector<8x1xf32>
    %216 = vector.broadcast %215 : vector<8x1xf32> to vector<8x8xf32>
    %217 = arith.subf %213, %216 : vector<8x8xf32>
    %218 = math.exp %217 : vector<8x8xf32>
    %cst_89 = arith.constant dense<0.000000e+00> : vector<8xf32>
    %219 = vector.multi_reduction <add>, %218, %cst_89 [1] : vector<8x8xf32> to vector<8xf32>
    %220 = vector.shape_cast %219 : vector<8xf32> to vector<8x1xf32>
    %221 = tpu.reciprocal %220 {approx = true} : vector<8x1xf32> -> vector<8x1xf32>
    %222 = vector.broadcast %221 : vector<8x1xf32> to vector<8x8xf32>
    %223 = arith.mulf %218, %222 : vector<8x8xf32>
    %224 = arith.truncf %223 : vector<8x8xf32> to vector<8x8xbf16>
    %cst_90 = arith.constant dense<0.000000e+00> : vector<8x16xf32>
    %225 = tpu.matmul %224, %211, %cst_90 {dimension_numbers = #tpu.dot_dimension_numbers<[1], [0], [0], [1], [0, 0, 1, 1], [], []>} : vector<8x8xbf16>, vector<8x16xbf16>, vector<8x16xf32> -> vector<8x16xf32>
    %226 = vector.extract_strided_slice %207 {offsets = [0, 16], sizes = [8, 16], strides = [1, 1]} : vector<16x96xbf16> to vector<8x16xbf16>
    %227 = vector.extract_strided_slice %207 {offsets = [0, 48], sizes = [8, 16], strides = [1, 1]} : vector<16x96xbf16> to vector<8x16xbf16>
    %228 = vector.extract_strided_slice %207 {offsets = [0, 80], sizes = [8, 16], strides = [1, 1]} : vector<16x96xbf16> to vector<8x16xbf16>
    "tpu.trace_start"() <{level = 10 : i32, message = "qd,kd->qk"}> : () -> ()
    %cst_91 = arith.constant dense<0.000000e+00> : vector<8x8xf32>
    %229 = tpu.matmul %226, %227, %cst_91 {dimension_numbers = #tpu.dot_dimension_numbers<[1], [1], [0], [0], [0, 0, 1, 0], [], []>} : vector<8x16xbf16>, vector<8x16xbf16>, vector<8x8xf32> -> vector<8x8xf32>
    "tpu.trace_stop"() : () -> ()
    %230 = arith.addf %229, %208 : vector<8x8xf32>
    %cst_92 = arith.constant dense<0xFF800000> : vector<8xf32>
    %231 = vector.multi_reduction <maximumf>, %230, %cst_92 [1] : vector<8x8xf32> to vector<8xf32>
    %232 = vector.shape_cast %231 : vector<8xf32> to vector<8x1xf32>
    %233 = vector.broadcast %232 : vector<8x1xf32> to vector<8x8xf32>
    %234 = arith.subf %230, %233 : vector<8x8xf32>
    %235 = math.exp %234 : vector<8x8xf32>
    %cst_93 = arith.constant dense<0.000000e+00> : vector<8xf32>
    %236 = vector.multi_reduction <add>, %235, %cst_93 [1] : vector<8x8xf32> to vector<8xf32>
    %237 = vector.shape_cast %236 : vector<8xf32> to vector<8x1xf32>
    %238 = tpu.reciprocal %237 {approx = true} : vector<8x1xf32> -> vector<8x1xf32>
    %239 = vector.broadcast %238 : vector<8x1xf32> to vector<8x8xf32>
    %240 = arith.mulf %235, %239 : vector<8x8xf32>
    %241 = arith.truncf %240 : vector<8x8xf32> to vector<8x8xbf16>
    %cst_94 = arith.constant dense<0.000000e+00> : vector<8x16xf32>
    %242 = tpu.matmul %241, %228, %cst_94 {dimension_numbers = #tpu.dot_dimension_numbers<[1], [0], [0], [1], [0, 0, 1, 1], [], []>} : vector<8x8xbf16>, vector<8x16xbf16>, vector<8x16xf32> -> vector<8x16xf32>
    %243 = tpu.concatenate %225, %242 in 1 : vector<8x16xf32>, vector<8x16xf32> -> vector<8x32xf32>
    %244 = vector.extract_strided_slice %25 {offsets = [8, 0], sizes = [8, 8], strides = [1, 1]} : vector<16x8xf32> to vector<8x8xf32>
    %245 = vector.extract_strided_slice %207 {offsets = [8, 0], sizes = [8, 16], strides = [1, 1]} : vector<16x96xbf16> to vector<8x16xbf16>
    %246 = vector.extract_strided_slice %207 {offsets = [8, 32], sizes = [8, 16], strides = [1, 1]} : vector<16x96xbf16> to vector<8x16xbf16>
    %247 = vector.extract_strided_slice %207 {offsets = [8, 64], sizes = [8, 16], strides = [1, 1]} : vector<16x96xbf16> to vector<8x16xbf16>
    "tpu.trace_start"() <{level = 10 : i32, message = "qd,kd->qk"}> : () -> ()
    %cst_95 = arith.constant dense<0.000000e+00> : vector<8x8xf32>
    %248 = tpu.matmul %245, %246, %cst_95 {dimension_numbers = #tpu.dot_dimension_numbers<[1], [1], [0], [0], [0, 0, 1, 0], [], []>} : vector<8x16xbf16>, vector<8x16xbf16>, vector<8x8xf32> -> vector<8x8xf32>
    "tpu.trace_stop"() : () -> ()
    %249 = arith.addf %248, %244 : vector<8x8xf32>
    %cst_96 = arith.constant dense<0xFF800000> : vector<8xf32>
    %250 = vector.multi_reduction <maximumf>, %249, %cst_96 [1] : vector<8x8xf32> to vector<8xf32>
    %251 = vector.shape_cast %250 : vector<8xf32> to vector<8x1xf32>
    %252 = vector.broadcast %251 : vector<8x1xf32> to vector<8x8xf32>
    %253 = arith.subf %249, %252 : vector<8x8xf32>
    %254 = math.exp %253 : vector<8x8xf32>
    %cst_97 = arith.constant dense<0.000000e+00> : vector<8xf32>
    %255 = vector.multi_reduction <add>, %254, %cst_97 [1] : vector<8x8xf32> to vector<8xf32>
    %256 = vector.shape_cast %255 : vector<8xf32> to vector<8x1xf32>
    %257 = tpu.reciprocal %256 {approx = true} : vector<8x1xf32> -> vector<8x1xf32>
    %258 = vector.broadcast %257 : vector<8x1xf32> to vector<8x8xf32>
    %259 = arith.mulf %254, %258 : vector<8x8xf32>
    %260 = arith.truncf %259 : vector<8x8xf32> to vector<8x8xbf16>
    %cst_98 = arith.constant dense<0.000000e+00> : vector<8x16xf32>
    %261 = tpu.matmul %260, %247, %cst_98 {dimension_numbers = #tpu.dot_dimension_numbers<[1], [0], [0], [1], [0, 0, 1, 1], [], []>} : vector<8x8xbf16>, vector<8x16xbf16>, vector<8x16xf32> -> vector<8x16xf32>
    %262 = vector.extract_strided_slice %207 {offsets = [8, 16], sizes = [8, 16], strides = [1, 1]} : vector<16x96xbf16> to vector<8x16xbf16>
    %263 = vector.extract_strided_slice %207 {offsets = [8, 48], sizes = [8, 16], strides = [1, 1]} : vector<16x96xbf16> to vector<8x16xbf16>
    %264 = vector.extract_strided_slice %207 {offsets = [8, 80], sizes = [8, 16], strides = [1, 1]} : vector<16x96xbf16> to vector<8x16xbf16>
    "tpu.trace_start"() <{level = 10 : i32, message = "qd,kd->qk"}> : () -> ()
    %cst_99 = arith.constant dense<0.000000e+00> : vector<8x8xf32>
    %265 = tpu.matmul %262, %263, %cst_99 {dimension_numbers = #tpu.dot_dimension_numbers<[1], [1], [0], [0], [0, 0, 1, 0], [], []>} : vector<8x16xbf16>, vector<8x16xbf16>, vector<8x8xf32> -> vector<8x8xf32>
    "tpu.trace_stop"() : () -> ()
    %266 = arith.addf %265, %244 : vector<8x8xf32>
    %cst_100 = arith.constant dense<0xFF800000> : vector<8xf32>
    %267 = vector.multi_reduction <maximumf>, %266, %cst_100 [1] : vector<8x8xf32> to vector<8xf32>
    %268 = vector.shape_cast %267 : vector<8xf32> to vector<8x1xf32>
    %269 = vector.broadcast %268 : vector<8x1xf32> to vector<8x8xf32>
    %270 = arith.subf %266, %269 : vector<8x8xf32>
    %271 = math.exp %270 : vector<8x8xf32>
    %cst_101 = arith.constant dense<0.000000e+00> : vector<8xf32>
    %272 = vector.multi_reduction <add>, %271, %cst_101 [1] : vector<8x8xf32> to vector<8xf32>
    %273 = vector.shape_cast %272 : vector<8xf32> to vector<8x1xf32>
    %274 = tpu.reciprocal %273 {approx = true} : vector<8x1xf32> -> vector<8x1xf32>
    %275 = vector.broadcast %274 : vector<8x1xf32> to vector<8x8xf32>
    %276 = arith.mulf %271, %275 : vector<8x8xf32>
    %277 = arith.truncf %276 : vector<8x8xf32> to vector<8x8xbf16>
    %cst_102 = arith.constant dense<0.000000e+00> : vector<8x16xf32>
    %278 = tpu.matmul %277, %264, %cst_102 {dimension_numbers = #tpu.dot_dimension_numbers<[1], [0], [0], [1], [0, 0, 1, 1], [], []>} : vector<8x8xbf16>, vector<8x16xbf16>, vector<8x16xf32> -> vector<8x16xf32>
    %279 = tpu.concatenate %261, %278 in 1 : vector<8x16xf32>, vector<8x16xf32> -> vector<8x32xf32>
    %280 = tpu.concatenate %243, %279 in 0 : vector<8x32xf32>, vector<8x32xf32> -> vector<16x32xf32>
    %281 = arith.truncf %280 : vector<16x32xf32> to vector<16x32xbf16>
    %c1_103 = arith.constant 1 : index
    %c0_104 = arith.constant 0 : index
    %c0_105 = arith.constant 0 : index
    %282 = vector.load %arg6[%c1_103, %c0_104, %c0_105] : memref<2x32x32xbf16, #tpu.memory_space<vmem>>, vector<1x32x32xbf16>
    %283 = vector.shape_cast %282 : vector<1x32x32xbf16> to vector<32x32xbf16>
    %c1_106 = arith.constant 1 : index
    %c0_107 = arith.constant 0 : index
    %c0_108 = arith.constant 0 : index
    %284 = vector.load %arg7[%c1_106, %c0_107, %c0_108] : memref<2x1x32xf32, #tpu.memory_space<vmem>>, vector<1x1x32xf32>
    %285 = vector.shape_cast %284 : vector<1x1x32xf32> to vector<1x32xf32>
    %cst_109 = arith.constant dense<0.000000e+00> : vector<16x32xf32>
    %286 = tpu.matmul %281, %283, %cst_109 {dimension_numbers = #tpu.dot_dimension_numbers<[1], [0], [0], [1], [0, 0, 1, 1], [], []>} : vector<16x32xbf16>, vector<32x32xbf16>, vector<16x32xf32> -> vector<16x32xf32>
    %287 = vector.broadcast %285 : vector<1x32xf32> to vector<16x32xf32>
    %288 = arith.addf %286, %287 : vector<16x32xf32>
    %289 = arith.addf %288, %198 : vector<16x32xf32>
    %c1_110 = arith.constant 1 : index
    %c0_111 = arith.constant 0 : index
    %c0_112 = arith.constant 0 : index
    %290 = vector.load %arg8[%c1_110, %c0_111, %c0_112] : memref<2x1x32xf32, #tpu.memory_space<vmem>>, vector<1x1x32xf32>
    %291 = vector.shape_cast %290 : vector<1x1x32xf32> to vector<1x32xf32>
    %c1_113 = arith.constant 1 : index
    %c0_114 = arith.constant 0 : index
    %c0_115 = arith.constant 0 : index
    %292 = vector.load %arg9[%c1_113, %c0_114, %c0_115] : memref<2x1x32xf32, #tpu.memory_space<vmem>>, vector<1x1x32xf32>
    %293 = vector.shape_cast %292 : vector<1x1x32xf32> to vector<1x32xf32>
    %cst_116 = arith.constant dense<0.000000e+00> : vector<16xf32>
    %294 = vector.multi_reduction <add>, %289, %cst_116 [1] : vector<16x32xf32> to vector<16xf32>
    %295 = vector.shape_cast %294 : vector<16xf32> to vector<16x1xf32>
    %cst_117 = arith.constant 3.200000e+01 : f32
    %296 = vector.broadcast %cst_117 : f32 to vector<16x1xf32>
    %297 = arith.divf %295, %296 : vector<16x1xf32>
    %298 = vector.broadcast %297 : vector<16x1xf32> to vector<16x32xf32>
    %299 = arith.subf %289, %298 : vector<16x32xf32>
    %300 = arith.mulf %299, %299 : vector<16x32xf32>
    %cst_118 = arith.constant dense<0.000000e+00> : vector<16xf32>
    %301 = vector.multi_reduction <add>, %300, %cst_118 [1] : vector<16x32xf32> to vector<16xf32>
    %302 = vector.shape_cast %301 : vector<16xf32> to vector<16x1xf32>
    %cst_119 = arith.constant 3.200000e+01 : f32
    %303 = vector.broadcast %cst_119 : f32 to vector<16x1xf32>
    %304 = arith.divf %302, %303 : vector<16x1xf32>
    %305 = vector.broadcast %297 : vector<16x1xf32> to vector<16x32xf32>
    %306 = arith.subf %289, %305 : vector<16x32xf32>
    %cst_120 = arith.constant 9.99999996E-13 : f32
    %307 = vector.broadcast %cst_120 : f32 to vector<16x1xf32>
    %308 = arith.addf %304, %307 : vector<16x1xf32>
    %309 = math.rsqrt %308 : vector<16x1xf32>
    %310 = vector.broadcast %309 : vector<16x1xf32> to vector<16x32xf32>
    %311 = arith.mulf %306, %310 : vector<16x32xf32>
    %312 = vector.broadcast %291 : vector<1x32xf32> to vector<16x32xf32>
    %313 = arith.mulf %311, %312 : vector<16x32xf32>
    %314 = vector.broadcast %293 : vector<1x32xf32> to vector<16x32xf32>
    %315 = arith.addf %313, %314 : vector<16x32xf32>
    %316 = arith.truncf %315 : vector<16x32xf32> to vector<16x32xbf16>
    %c1_121 = arith.constant 1 : index
    %c0_122 = arith.constant 0 : index
    %c0_123 = arith.constant 0 : index
    %317 = vector.load %arg10[%c1_121, %c0_122, %c0_123] : memref<2x32x64xbf16, #tpu.memory_space<vmem>>, vector<1x32x64xbf16>
    %318 = vector.shape_cast %317 : vector<1x32x64xbf16> to vector<32x64xbf16>
    %c1_124 = arith.constant 1 : index
    %c0_125 = arith.constant 0 : index
    %c0_126 = arith.constant 0 : index
    %319 = vector.load %arg11[%c1_124, %c0_125, %c0_126] : memref<2x1x64xf32, #tpu.memory_space<vmem>>, vector<1x1x64xf32>
    %320 = vector.shape_cast %319 : vector<1x1x64xf32> to vector<1x64xf32>
    %cst_127 = arith.constant dense<0.000000e+00> : vector<16x64xf32>
    %321 = tpu.matmul %316, %318, %cst_127 {dimension_numbers = #tpu.dot_dimension_numbers<[1], [0], [0], [1], [0, 0, 1, 1], [], []>} : vector<16x32xbf16>, vector<32x64xbf16>, vector<16x64xf32> -> vector<16x64xf32>
    %322 = vector.broadcast %320 : vector<1x64xf32> to vector<16x64xf32>
    %323 = arith.addf %321, %322 : vector<16x64xf32>
    %324 = arith.mulf %323, %323 : vector<16x64xf32>
    %325 = arith.mulf %323, %324 : vector<16x64xf32>
    %cst_128 = arith.constant 4.471500e-02 : f32
    %326 = vector.broadcast %cst_128 : f32 to vector<16x64xf32>
    %327 = arith.mulf %326, %325 : vector<16x64xf32>
    %328 = arith.addf %323, %327 : vector<16x64xf32>
    %cst_129 = arith.constant 0.797884583 : f32
    %329 = vector.broadcast %cst_129 : f32 to vector<16x64xf32>
    %330 = arith.mulf %329, %328 : vector<16x64xf32>
    %331 = math.tanh %330 : vector<16x64xf32>
    %cst_130 = arith.constant 1.000000e+00 : f32
    %332 = vector.broadcast %cst_130 : f32 to vector<16x64xf32>
    %333 = arith.addf %332, %331 : vector<16x64xf32>
    %cst_131 = arith.constant 5.000000e-01 : f32
    %334 = vector.broadcast %cst_131 : f32 to vector<16x64xf32>
    %335 = arith.mulf %334, %333 : vector<16x64xf32>
    %336 = arith.mulf %323, %335 : vector<16x64xf32>
    %337 = arith.truncf %336 : vector<16x64xf32> to vector<16x64xbf16>
    %c1_132 = arith.constant 1 : index
    %c0_133 = arith.constant 0 : index
    %c0_134 = arith.constant 0 : index
    %338 = vector.load %arg12[%c1_132, %c0_133, %c0_134] : memref<2x64x32xbf16, #tpu.memory_space<vmem>>, vector<1x64x32xbf16>
    %339 = vector.shape_cast %338 : vector<1x64x32xbf16> to vector<64x32xbf16>
    %c1_135 = arith.constant 1 : index
    %c0_136 = arith.constant 0 : index
    %c0_137 = arith.constant 0 : index
    %340 = vector.load %arg13[%c1_135, %c0_136, %c0_137] : memref<2x1x32xf32, #tpu.memory_space<vmem>>, vector<1x1x32xf32>
    %341 = vector.shape_cast %340 : vector<1x1x32xf32> to vector<1x32xf32>
    %cst_138 = arith.constant dense<0.000000e+00> : vector<16x32xf32>
    %342 = tpu.matmul %337, %339, %cst_138 {dimension_numbers = #tpu.dot_dimension_numbers<[1], [0], [0], [1], [0, 0, 1, 1], [], []>} : vector<16x64xbf16>, vector<64x32xbf16>, vector<16x32xf32> -> vector<16x32xf32>
    %343 = vector.broadcast %341 : vector<1x32xf32> to vector<16x32xf32>
    %344 = arith.addf %342, %343 : vector<16x32xf32>
    %345 = arith.addf %344, %315 : vector<16x32xf32>
    %c1_139 = arith.constant 1 : index
    %c0_140 = arith.constant 0 : index
    %c0_141 = arith.constant 0 : index
    %346 = vector.load %arg14[%c1_139, %c0_140, %c0_141] : memref<2x1x32xf32, #tpu.memory_space<vmem>>, vector<1x1x32xf32>
    %347 = vector.shape_cast %346 : vector<1x1x32xf32> to vector<1x32xf32>
    %c1_142 = arith.constant 1 : index
    %c0_143 = arith.constant 0 : index
    %c0_144 = arith.constant 0 : index
    %348 = vector.load %arg15[%c1_142, %c0_143, %c0_144] : memref<2x1x32xf32, #tpu.memory_space<vmem>>, vector<1x1x32xf32>
    %349 = vector.shape_cast %348 : vector<1x1x32xf32> to vector<1x32xf32>
    %cst_145 = arith.constant dense<0.000000e+00> : vector<16xf32>
    %350 = vector.multi_reduction <add>, %345, %cst_145 [1] : vector<16x32xf32> to vector<16xf32>
    %351 = vector.shape_cast %350 : vector<16xf32> to vector<16x1xf32>
    %cst_146 = arith.constant 3.200000e+01 : f32
    %352 = vector.broadcast %cst_146 : f32 to vector<16x1xf32>
    %353 = arith.divf %351, %352 : vector<16x1xf32>
    %354 = vector.broadcast %353 : vector<16x1xf32> to vector<16x32xf32>
    %355 = arith.subf %345, %354 : vector<16x32xf32>
    %356 = arith.mulf %355, %355 : vector<16x32xf32>
    %cst_147 = arith.constant dense<0.000000e+00> : vector<16xf32>
    %357 = vector.multi_reduction <add>, %356, %cst_147 [1] : vector<16x32xf32> to vector<16xf32>
    %358 = vector.shape_cast %357 : vector<16xf32> to vector<16x1xf32>
    %cst_148 = arith.constant 3.200000e+01 : f32
    %359 = vector.broadcast %cst_148 : f32 to vector<16x1xf32>
    %360 = arith.divf %358, %359 : vector<16x1xf32>
    %361 = vector.broadcast %353 : vector<16x1xf32> to vector<16x32xf32>
    %362 = arith.subf %345, %361 : vector<16x32xf32>
    %cst_149 = arith.constant 9.99999996E-13 : f32
    %363 = vector.broadcast %cst_149 : f32 to vector<16x1xf32>
    %364 = arith.addf %360, %363 : vector<16x1xf32>
    %365 = math.rsqrt %364 : vector<16x1xf32>
    %366 = vector.broadcast %365 : vector<16x1xf32> to vector<16x32xf32>
    %367 = arith.mulf %362, %366 : vector<16x32xf32>
    %368 = vector.broadcast %347 : vector<1x32xf32> to vector<16x32xf32>
    %369 = arith.mulf %367, %368 : vector<16x32xf32>
    %370 = vector.broadcast %349 : vector<1x32xf32> to vector<16x32xf32>
    %371 = arith.addf %369, %370 : vector<16x32xf32>
    %372 = vector.extract_strided_slice %371 {offsets = [0, 0], sizes = [1, 32], strides = [1, 1]} : vector<16x32xf32> to vector<1x32xf32>
    %373 = vector.extract_strided_slice %371 {offsets = [8, 0], sizes = [1, 32], strides = [1, 1]} : vector<16x32xf32> to vector<1x32xf32>
    %374 = tpu.concatenate %372, %373 in 0 : vector<1x32xf32>, vector<1x32xf32> -> vector<2x32xf32>
    %375 = arith.truncf %374 : vector<2x32xf32> to vector<2x32xbf16>
    %c0_150 = arith.constant 0 : index
    %c0_151 = arith.constant 0 : index
    %376 = vector.load %arg16[%c0_150, %c0_151] : memref<32x32xbf16, #tpu.memory_space<vmem>>, vector<32x32xbf16>
    %c0_152 = arith.constant 0 : index
    %c0_153 = arith.constant 0 : index
    %377 = vector.load %arg17[%c0_152, %c0_153] : memref<1x32xf32, #tpu.memory_space<vmem>>, vector<1x32xf32>
    %cst_154 = arith.constant dense<0.000000e+00> : vector<2x32xf32>
    %378 = tpu.matmul %375, %376, %cst_154 {dimension_numbers = #tpu.dot_dimension_numbers<[1], [0], [0], [1], [0, 0, 1, 1], [], []>} : vector<2x32xbf16>, vector<32x32xbf16>, vector<2x32xf32> -> vector<2x32xf32>
    %379 = vector.broadcast %377 : vector<1x32xf32> to vector<2x32xf32>
    %380 = arith.addf %378, %379 : vector<2x32xf32>
    %381 = math.tanh %380 : vector<2x32xf32>
    %382 = arith.truncf %381 : vector<2x32xf32> to vector<2x32xbf16>
    %c0_155 = arith.constant 0 : index
    %c0_156 = arith.constant 0 : index
    %383 = vector.load %arg18[%c0_155, %c0_156] : memref<32x3xbf16, #tpu.memory_space<vmem>>, vector<32x3xbf16>
    %c0_157 = arith.constant 0 : index
    %c0_158 = arith.constant 0 : index
    %384 = vector.load %arg19[%c0_157, %c0_158] : memref<1x3xf32, #tpu.memory_space<vmem>>, vector<1x3xf32>
    %cst_159 = arith.constant dense<0.000000e+00> : vector<2x3xf32>
    %385 = tpu.matmul %382, %383, %cst_159 {dimension_numbers = #tpu.dot_dimension_numbers<[1], [0], [0], [1], [0, 0, 1, 1], [], []>} : vector<2x32xbf16>, vector<32x3xbf16>, vector<2x3xf32> -> vector<2x3xf32>
    %386 = vector.broadcast %384 : vector<1x3xf32> to vector<2x3xf32>
    %387 = arith.addf %385, %386 : vector<2x3xf32>
    %c0_160 = arith.constant 0 : index
    %c0_161 = arith.constant 0 : index
    %388 = vector.load %arg20[%c0_160, %c0_161] : memref<2x3xf32, #tpu.memory_space<vmem>>, vector<2x3xf32>
    tpu.vector_store %arg20[%c0_160, %c0_161], %387 {strides = array<i32>} : memref<2x3xf32, #tpu.memory_space<vmem>>, vector<2x3xf32>,
    return
  }
}

</mosaic_0001>

<llo_original>
// kernel: bert_classifier_forward.1
$region0: #{bert_classifier_forward.1}
  #allocation0 [shape = 'u32[]', space=smem, size = 0x4, offset = 0x4, fixed_abs, tag = 'smem constant byte address 0x4 - core index']
  #allocation1 [shape = 'u32[144,128]{1,0:T(1,128)}', space=vmem, size = 0x12000, scoped, tag = 'internal scratch']
  %s0 = inlined_call_operand.vmem [shape: f32[16,32], index: 0, kind: input, shape index: {}]
  %s1 = inlined_call_operand.vmem [shape: f32[16,8], index: 1, kind: input, shape index: {}]
  %s2 = inlined_call_operand.vmem [shape: f32[1,32], index: 2, kind: input, shape index: {}]
  %s3 = inlined_call_operand.vmem [shape: f32[1,32], index: 3, kind: input, shape index: {}]
  %s4 = inlined_call_operand.vmem [shape: bf16[2,32,96], index: 4, kind: input, shape index: {}]
  %s5 = inlined_call_operand.vmem [shape: f32[2,1,96], index: 5, kind: input, shape index: {}]
  %s6 = inlined_call_operand.vmem [shape: bf16[2,32,32], index: 6, kind: input, shape index: {}]
  %s7 = inlined_call_operand.vmem [shape: f32[2,1,32], index: 7, kind: input, shape index: {}]
  %s8 = inlined_call_operand.vmem [shape: f32[2,1,32], index: 8, kind: input, shape index: {}]
  %s9 = inlined_call_operand.vmem [shape: f32[2,1,32], index: 9, kind: input, shape index: {}]
  %s10 = inlined_call_operand.vmem [shape: bf16[2,32,64], index: 10, kind: input, shape index: {}]
  %s11 = inlined_call_operand.vmem [shape: f32[2,1,64], index: 11, kind: input, shape index: {}]
  %s12 = inlined_call_operand.vmem [shape: bf16[2,64,32], index: 12, kind: input, shape index: {}]
  %s13 = inlined_call_operand.vmem [shape: f32[2,1,32], index: 13, kind: input, shape index: {}]
  %s14 = inlined_call_operand.vmem [shape: f32[2,1,32], index: 14, kind: input, shape index: {}]
  %s15 = inlined_call_operand.vmem [shape: f32[2,1,32], index: 15, kind: input, shape index: {}]
  %s16 = inlined_call_operand.vmem [shape: bf16[32,32], index: 16, kind: input, shape index: {}]
  %s17 = inlined_call_operand.vmem [shape: f32[1,32], index: 17, kind: input, shape index: {}]
  %s18 = inlined_call_operand.vmem [shape: bf16[32,3], index: 18, kind: input, shape index: {}]
  %s19 = inlined_call_operand.vmem [shape: f32[1,3], index: 19, kind: input, shape index: {}]
  %s20 = inlined_call_operand.hbm [shape: f32[2,3], index: 20, kind: output, shape index: {}]
  %s21 = sld [smem:[#allocation0]]
  $region90: #{bert_classifier_forward.1} parent=0
    _
  %s23 = ssub.s32 1, %s21
  %s24 = scalar_select 0, %s23, %s21
  $region1: #{bert_classifier_forward.1} parent=0
    #allocation2 [shape = 'u8[1024]{0}', space=vmem, size = 0x400, scoped, tag = 'output window, operand 0, single buffered']
    #allocation3 [shape = 's32[1]{0}', space=sflag, size = 0x4, scoped, tag = 'scoped memory for bert_classifier_forward.1']
    %25 = vsyncpa [#allocation3], 0
    // Predicated region
    $region2: #{bert_classifier_forward.1} parent=1 // pred_check
      _
    $region3: #{bert_classifier_forward.1} parent=1 // pred_check_branch
      %27 = sbr.rel (0) target = $region5
    $region4: #{bert_classifier_forward.1} parent=1 // pred_region
      _
    $region5: #{bert_classifier_forward.1} parent=1 // pred_fallthru
      _
    // Predicated region
    $region6: #{bert_classifier_forward.1} parent=1 // pred_check
      _
    $region7: #{bert_classifier_forward.1} parent=1 // pred_check_branch
      %29 = sbr.rel (0) target = $region9
    $region8: #{bert_classifier_forward.1} parent=1 // pred_region
      _
    $region9: #{bert_classifier_forward.1} parent=1 // pred_fallthru
      _
    // Predicated region
    $region10: #{bert_classifier_forward.1} parent=1 // pred_check
      _
    $region11: #{bert_classifier_forward.1} parent=1 // pred_check_branch
      %31 = sbr.rel (0) target = $region13
    $region12: #{bert_classifier_forward.1} parent=1 // pred_region
      _
    $region13: #{bert_classifier_forward.1} parent=1 // pred_fallthru
      _
    // Predicated region
    $region14: #{bert_classifier_forward.1} parent=1 // pred_check
      _
    $region15: #{bert_classifier_forward.1} parent=1 // pred_check_branch
      %33 = sbr.rel (0) target = $region17
    $region16: #{bert_classifier_forward.1} parent=1 // pred_region
      _
    $region17: #{bert_classifier_forward.1} parent=1 // pred_fallthru
      _
    // Predicated region
    $region18: #{bert_classifier_forward.1} parent=1 // pred_check
      _
    $region19: #{bert_classifier_forward.1} parent=1 // pred_check_branch
      %35 = sbr.rel (0) target = $region21
    $region20: #{bert_classifier_forward.1} parent=1 // pred_region
      _
    $region21: #{bert_classifier_forward.1} parent=1 // pred_fallthru
      _
    // Predicated region
    $region22: #{bert_classifier_forward.1} parent=1 // pred_check
      _
    $region23: #{bert_classifier_forward.1} parent=1 // pred_check_branch
      %37 = sbr.rel (0) target = $region25
    $region24: #{bert_classifier_forward.1} parent=1 // pred_region
      _
    $region25: #{bert_classifier_forward.1} parent=1 // pred_fallthru
      _
    // Predicated region
    $region26: #{bert_classifier_forward.1} parent=1 // pred_check
      _
    $region27: #{bert_classifier_forward.1} parent=1 // pred_check_branch
      %39 = sbr.rel (0) target = $region29
    $region28: #{bert_classifier_forward.1} parent=1 // pred_region
      _
    $region29: #{bert_classifier_forward.1} parent=1 // pred_fallthru
      _
    // Predicated region
    $region30: #{bert_classifier_forward.1} parent=1 // pred_check
      _
    $region31: #{bert_classifier_forward.1} parent=1 // pred_check_branch
      %41 = sbr.rel (0) target = $region33
    $region32: #{bert_classifier_forward.1} parent=1 // pred_region
      _
    $region33: #{bert_classifier_forward.1} parent=1 // pred_fallthru
      _
    // Predicated region
    $region34: #{bert_classifier_forward.1} parent=1 // pred_check
      _
    $region35: #{bert_classifier_forward.1} parent=1 // pred_check_branch
      %43 = sbr.rel (0) target = $region37
    $region36: #{bert_classifier_forward.1} parent=1 // pred_region
      _
    $region37: #{bert_classifier_forward.1} parent=1 // pred_fallthru
      _
    // Predicated region
    $region38: #{bert_classifier_forward.1} parent=1 // pred_check
      _
    $region39: #{bert_classifier_forward.1} parent=1 // pred_check_branch
      %45 = sbr.rel (0) target = $region41
    $region40: #{bert_classifier_forward.1} parent=1 // pred_region
      _
    $region41: #{bert_classifier_forward.1} parent=1 // pred_fallthru
      _
    // Predicated region
    $region42: #{bert_classifier_forward.1} parent=1 // pred_check
      _
    $region43: #{bert_classifier_forward.1} parent=1 // pred_check_branch
      %47 = sbr.rel (0) target = $region45
    $region44: #{bert_classifier_forward.1} parent=1 // pred_region
      _
    $region45: #{bert_classifier_forward.1} parent=1 // pred_fallthru
      _
    // Predicated region
    $region46: #{bert_classifier_forward.1} parent=1 // pred_check
      _
    $region47: #{bert_classifier_forward.1} parent=1 // pred_check_branch
      %49 = sbr.rel (0) target = $region49
    $region48: #{bert_classifier_forward.1} parent=1 // pred_region
      _
    $region49: #{bert_classifier_forward.1} parent=1 // pred_fallthru
      _
    // Predicated region
    $region50: #{bert_classifier_forward.1} parent=1 // pred_check
      _
    $region51: #{bert_classifier_forward.1} parent=1 // pred_check_branch
      %51 = sbr.rel (0) target = $region53
    $region52: #{bert_classifier_forward.1} parent=1 // pred_region
      _
    $region53: #{bert_classifier_forward.1} parent=1 // pred_fallthru
      _
    // Predicated region
    $region54: #{bert_classifier_forward.1} parent=1 // pred_check
      _
    $region55: #{bert_classifier_forward.1} parent=1 // pred_check_branch
      %53 = sbr.rel (0) target = $region57
    $region56: #{bert_classifier_forward.1} parent=1 // pred_region
      _
    $region57: #{bert_classifier_forward.1} parent=1 // pred_fallthru
      _
    // Predicated region
    $region58: #{bert_classifier_forward.1} parent=1 // pred_check
      _
    $region59: #{bert_classifier_forward.1} parent=1 // pred_check_branch
      %55 = sbr.rel (0) target = $region61
    $region60: #{bert_classifier_forward.1} parent=1 // pred_region
      _
    $region61: #{bert_classifier_forward.1} parent=1 // pred_fallthru
      _
    // Predicated region
    $region62: #{bert_classifier_forward.1} parent=1 // pred_check
      _
    $region63: #{bert_classifier_forward.1} parent=1 // pred_check_branch
      %57 = sbr.rel (0) target = $region65
    $region64: #{bert_classifier_forward.1} parent=1 // pred_region
      _
    $region65: #{bert_classifier_forward.1} parent=1 // pred_fallthru
      _
    // Predicated region
    $region66: #{bert_classifier_forward.1} parent=1 // pred_check
      _
    $region67: #{bert_classifier_forward.1} parent=1 // pred_check_branch
      %59 = sbr.rel (0) target = $region69
    $region68: #{bert_classifier_forward.1} parent=1 // pred_region
      _
    $region69: #{bert_classifier_forward.1} parent=1 // pred_fallthru
      _
    // Predicated region
    $region70: #{bert_classifier_forward.1} parent=1 // pred_check
      _
    $region71: #{bert_classifier_forward.1} parent=1 // pred_check_branch
      %61 = sbr.rel (0) target = $region73
    $region72: #{bert_classifier_forward.1} parent=1 // pred_region
      _
    $region73: #{bert_classifier_forward.1} parent=1 // pred_fallthru
      _
    // Predicated region
    $region74: #{bert_classifier_forward.1} parent=1 // pred_check
      _
    $region75: #{bert_classifier_forward.1} parent=1 // pred_check_branch
      %63 = sbr.rel (0) target = $region77
    $region76: #{bert_classifier_forward.1} parent=1 // pred_region
      _
    $region77: #{bert_classifier_forward.1} parent=1 // pred_fallthru
      _
    // Predicated region
    $region78: #{bert_classifier_forward.1} parent=1 // pred_check
      _
    $region79: #{bert_classifier_forward.1} parent=1 // pred_check_branch
      %65 = sbr.rel (0) target = $region81
    $region80: #{bert_classifier_forward.1} parent=1 // pred_region
      _
    $region81: #{bert_classifier_forward.1} parent=1 // pred_fallthru
      _
    %v67 = vld [vmem:[%s0] sm:$0xff]
    %v68 = vld [vmem:[%s0 + $0x8] sm:$0xff]
    %v69 = vld [vmem:[%s2] sm:$0x1]
    %v70 = vld [vmem:[%s3] sm:$0x1]
    %vm71 = vcmask 261120
    %v72 = vsel %vm71, %v67, 0.0
    %73 = vadd.xlane.f32.xlu0 %v72
    %v74 = vpop.xlane.xlu0 %73
    %v75 = vsel %vm71, %v68, 0.0
    %76 = vadd.xlane.f32.xlu0 %v75
    %v77 = vpop.xlane.xlu0 %76
    %v78 = vrcp.pop 32.0
    %v79 = vmul.f32 %v74, %v78
    %v80 = vmul.f32 %v77, %v78
    %v81 = vsub.f32 %v67, %v79
    %v82 = vsub.f32 %v68, %v80
    %v83 = vmul.f32 %v81, %v81
    %v84 = vmul.f32 %v82, %v82
    %v85 = vsel %vm71, %v83, 0.0
    %86 = vadd.xlane.f32.xlu0 %v85
    %v87 = vpop.xlane.xlu0 %86
    %v88 = vsel %vm71, %v84, 0.0
    %89 = vadd.xlane.f32.xlu0 %v88
    %v90 = vpop.xlane.xlu0 %89
    %v91 = vmul.f32 %v87, %v78
    %v92 = vmul.f32 %v90, %v78
    %v93 = vadd.f32 %v91, 1e-12
    %v94 = vadd.f32 %v92, 1e-12
    %v95 = vrsqrt.pop %v93
    %v96 = vrsqrt.pop %v94
    %v97 = vmul.f32 %v81, %v95
    %v98 = vmul.f32 %v82, %v96
    %v100 = vlaneseq
    %v101 = vshrl.u32 %v100, 7
    %v102 = vsub.s32 0, %v101
    %v103 = vrot.slane %v69, %v102
    %v105 = vmul.f32 %v97, %v103
    %v106 = vmul.f32 %v98, %v103
    %v108 = vlaneseq
    %v109 = vshrl.u32 %v108, 7
    %v110 = vsub.s32 0, %v109
    %v111 = vrot.slane %v70, %v110
    %v113 = vadd.f32 %v105, %v111
    %v114 = vadd.f32 %v106, %v111
    %v115 = vld [vmem:[%s1] sm:$0xff]
    %v116 = vld [vmem:[%s1 + $0x8] sm:$0xff]
    %v117 = vpack.c.bf16 %v114, %v113
    %v118 = vld [vmem:[%s4] sm:$0xf]
    %v119 = vld [vmem:[%s4 + $0x4] sm:$0xf]
    %v120 = vld [vmem:[%s4 + $0x8] sm:$0xf]
    %v121 = vld [vmem:[%s4 + $0xc] sm:$0xf]
    %v122 = vld [vmem:[%s5] sm:$0x1]
    %v124 = vlaneseq
    %v125 = vshrl.u32 %v124, 7
    %v126 = vsub.s32 0, %v125
    %v127 = vrot.slane %v122, %v126
    %v133 = vunpack.c.l.b16 %v118
    %v134 = vunpack.c.l.b16 %v119
    %v135 = vunpack.c.l.b16 %v120
    %v136 = vunpack.c.l.b16 %v121
    %v137 = vpack.c.b16 %v134, %v133
    %v138 = vpack.c.b16 %v136, %v135
    %v142 = vsel %vm71, %v117, 0
    %144 = vmatprep.subr.bf16.mxu0 0
    %145 = vmatpush1.bf16.msra.mxu0 %v137
    %146 = vmatprep.subr.bf16.mxu0 0
    %147 = vmatpush1.bf16.msra.mxu0 %v138
    %148 = vmatprep.subr.bf16.mxu0 0
    %149 = vmatpush1.bf16.msra.mxu0 0
    %150 = vmatprep.subr.bf16.mxu0 0
    %151 = vmatpush1.bf16.msra.mxu0 0
    %152 = vmatprep.subr.bf16.mxu0 0
    %153 = vmatpush1.bf16.msra.mxu0 0
    %154 = vmatprep.subr.bf16.mxu0 0
    %155 = vmatpush1.bf16.msra.mxu0 0
    %156 = vmatprep.subr.bf16.mxu0 0
    %157 = vmatpush1.bf16.msra.mxu0 0
    %158 = vmatprep.subr.bf16.mxu0 0
    %159 = vmatpush1.bf16.msra.mxu0 0
    %160 = vmatprep.subr.bf16.mxu0 0
    %161 = vmatpush1.bf16.msra.mxu0 0
    %162 = vmatprep.subr.bf16.mxu0 0
    %163 = vmatpush1.bf16.msra.mxu0 0
    %164 = vmatprep.subr.bf16.mxu0 0
    %165 = vmatpush1.bf16.msra.mxu0 0
    %166 = vmatprep.subr.bf16.mxu0 0
    %167 = vmatpush1.bf16.msra.mxu0 0
    %168 = vmatprep.subr.bf16.mxu0 0
    %169 = vmatpush1.bf16.msra.mxu0 0
    %170 = vmatprep.subr.bf16.mxu0 0
    %171 = vmatpush1.bf16.msra.mxu0 0
    %172 = vmatprep.subr.bf16.mxu0 0
    %173 = vmatpush1.bf16.msra.mxu0 0
    %174 = vmatprep.subr.bf16.mxu0 0
    %175 = vmatpush1.bf16.msra.mxu0 0
    %176 = vmatprep.mubr.bf16.mxu0 0
    %177 = vmatmul.mubr.bf16.gmra.mrb[0].mxu0 %v142
    %v178 = vpop.f32.mrb[0].mxu0
    %v179 = vadd.f32 %v127, %v178
    %v180 = vpop.f32.mrb[0].mxu0
    %v181 = vpop.f32.mrb[0].mxu0
    %v182 = vadd.f32 %v127, %v181
    %v183 = vpop.f32.mrb[0].mxu0
    %184 = vdwg.mxu0
    %v185 = vpack.c.bf16 %v182, %v179
    %187 = vrot.lane.b32.xlu0 %v185, 96
    %v188 = vpop.permute.xlu0 %187
    %vm189 = vcmask 130048
    %v191 = vsel %vm189, %v185, 0
    %v194 = vsel %vm189, %v188, 0
    %196 = vmatprep.subr.bf16.mxu0 0
    %197 = vmatpush1.bf16.xpose.msra.mxu0 %v194
    %198 = vmatprep.subr.bf16.mxu0 0
    %199 = vmatpush1.bf16.xpose.msra.mxu0 0
    %200 = vmatprep.subr.bf16.mxu0 0
    %201 = vmatpush1.bf16.xpose.msra.mxu0 0
    %202 = vmatprep.subr.bf16.mxu0 0
    %203 = vmatpush1.bf16.xpose.msra.mxu0 0
    %204 = vmatprep.subr.bf16.mxu0 0
    %205 = vmatpush1.bf16.xpose.msra.mxu0 0
    %206 = vmatprep.subr.bf16.mxu0 0
    %207 = vmatpush1.bf16.xpose.msra.mxu0 0
    %208 = vmatprep.subr.bf16.mxu0 0
    %209 = vmatpush1.bf16.xpose.msra.mxu0 0
    %210 = vmatprep.subr.bf16.mxu0 0
    %211 = vmatpush1.bf16.xpose.msra.mxu0 0
    %212 = vmatprep.subr.bf16.mxu0 0
    %213 = vmatpush1.bf16.xpose.msra.mxu0 0
    %214 = vmatprep.subr.bf16.mxu0 0
    %215 = vmatpush1.bf16.xpose.msra.mxu0 0
    %216 = vmatprep.subr.bf16.mxu0 0
    %217 = vmatpush1.bf16.xpose.msra.mxu0 0
    %218 = vmatprep.subr.bf16.mxu0 0
    %219 = vmatpush1.bf16.xpose.msra.mxu0 0
    %220 = vmatprep.subr.bf16.mxu0 0
    %221 = vmatpush1.bf16.xpose.msra.mxu0 0
    %222 = vmatprep.subr.bf16.mxu0 0
    %223 = vmatpush1.bf16.xpose.msra.mxu0 0
    %224 = vmatprep.subr.bf16.mxu0 0
    %225 = vmatpush1.bf16.xpose.msra.mxu0 0
    %226 = vmatprep.subr.bf16.mxu0 0
    %227 = vmatpush1.bf16.xpose.msra.mxu0 0
    %228 = vmatprep.mubr.bf16.mxu0 0
    %229 = vmatmul.mubr.bf16.gmra.mrb[0].mxu0 %v191
    %v230 = vpop.f32.mrb[0].mxu0
    %v231 = vadd.f32 %v115, %v230
    %v232 = vpop.f32.mrb[0].mxu0
    %v233 = vpop.f32.mrb[0].mxu0
    %v234 = vpop.f32.mrb[0].mxu0
    %235 = vdwg.mxu0
    %vm236 = vcmask 64512
    %v237 = vsel %vm236, %v231, -inf
    %238 = vmax.xlane.f32.xlu0 %v237
    %v239 = vpop.xlane.xlu0 %238
    %v240 = vsub.f32 %v231, %v239
    %v241 = vmul.f32 %v240, 1.442695
    %v242 = vpow.pop %v241
    %v243 = vsel %vm236, %v242, 0.0
    %244 = vadd.xlane.f32.xlu0 %v243
    %v245 = vpop.xlane.xlu0 %244
    %v246 = vrcp.pop %v245
    %v247 = vmul.f32 %v242, %v246
    %v248 = vpack.c.bf16 %v247, %v247
    %249 = vrot.lane.b32.xlu0 %v185, 64
    %v250 = vpop.permute.xlu0 %249
    %v252 = vsel %vm236, %v248, 0
    %vm254 = vcmask 1043456
    %v256 = vsel %vm254, %v250, 0
    %258 = vmatprep.subr.bf16.mxu0 0
    %259 = vmatpush1.bf16.msra.mxu0 %v256
    %260 = vmatprep.subr.bf16.mxu0 0
    %261 = vmatpush1.bf16.msra.mxu0 0
    %262 = vmatprep.subr.bf16.mxu0 0
    %263 = vmatpush1.bf16.msra.mxu0 0
    %264 = vmatprep.subr.bf16.mxu0 0
    %265 = vmatpush1.bf16.msra.mxu0 0
    %266 = vmatprep.subr.bf16.mxu0 0
    %267 = vmatpush1.bf16.msra.mxu0 0
    %268 = vmatprep.subr.bf16.mxu0 0
    %269 = vmatpush1.bf16.msra.mxu0 0
    %270 = vmatprep.subr.bf16.mxu0 0
    %271 = vmatpush1.bf16.msra.mxu0 0
    %272 = vmatprep.subr.bf16.mxu0 0
    %273 = vmatpush1.bf16.msra.mxu0 0
    %274 = vmatprep.subr.bf16.mxu0 0
    %275 = vmatpush1.bf16.msra.mxu0 0
    %276 = vmatprep.subr.bf16.mxu0 0
    %277 = vmatpush1.bf16.msra.mxu0 0
    %278 = vmatprep.subr.bf16.mxu0 0
    %279 = vmatpush1.bf16.msra.mxu0 0
    %280 = vmatprep.subr.bf16.mxu0 0
    %281 = vmatpush1.bf16.msra.mxu0 0
    %282 = vmatprep.subr.bf16.mxu0 0
    %283 = vmatpush1.bf16.msra.mxu0 0
    %284 = vmatprep.subr.bf16.mxu0 0
    %285 = vmatpush1.bf16.msra.mxu0 0
    %286 = vmatprep.subr.bf16.mxu0 0
    %287 = vmatpush1.bf16.msra.mxu0 0
    %288 = vmatprep.subr.bf16.mxu0 0
    %289 = vmatpush1.bf16.msra.mxu0 0
    %290 = vmatprep.mubr.bf16.mxu0 0
    %291 = vmatmul.mubr.bf16.gmra.mrb[0].mxu0 %v252
    %v292 = vpop.f32.mrb[0].mxu0
    %v293 = vadd.f32 0.0, %v292
    %v294 = vpop.f32.mrb[0].mxu0
    %v295 = vpop.f32.mrb[0].mxu0
    %v296 = vpop.f32.mrb[0].mxu0
    %297 = vdwg.mxu0
    %298 = vrot.lane.b32.xlu0 %v185, 112
    %v299 = vpop.permute.xlu0 %298
    %300 = vrot.lane.b32.xlu0 %v185, 80
    %v301 = vpop.permute.xlu0 %300
    %v303 = vsel %vm189, %v299, 0
    %v306 = vsel %vm189, %v301, 0
    %308 = vmatprep.subr.bf16.mxu0 0
    %309 = vmatpush1.bf16.xpose.msra.mxu0 %v306
    %310 = vmatprep.subr.bf16.mxu0 0
    %311 = vmatpush1.bf16.xpose.msra.mxu0 0
    %312 = vmatprep.subr.bf16.mxu0 0
    %313 = vmatpush1.bf16.xpose.msra.mxu0 0
    %314 = vmatprep.subr.bf16.mxu0 0
    %315 = vmatpush1.bf16.xpose.msra.mxu0 0
    %316 = vmatprep.subr.bf16.mxu0 0
    %317 = vmatpush1.bf16.xpose.msra.mxu0 0
    %318 = vmatprep.subr.bf16.mxu0 0
    %319 = vmatpush1.bf16.xpose.msra.mxu0 0
    %320 = vmatprep.subr.bf16.mxu0 0
    %321 = vmatpush1.bf16.xpose.msra.mxu0 0
    %322 = vmatprep.subr.bf16.mxu0 0
    %323 = vmatpush1.bf16.xpose.msra.mxu0 0
    %324 = vmatprep.subr.bf16.mxu0 0
    %325 = vmatpush1.bf16.xpose.msra.mxu0 0
    %326 = vmatprep.subr.bf16.mxu0 0
    %327 = vmatpush1.bf16.xpose.msra.mxu0 0
    %328 = vmatprep.subr.bf16.mxu0 0
    %329 = vmatpush1.bf16.xpose.msra.mxu0 0
    %330 = vmatprep.subr.bf16.mxu0 0
    %331 = vmatpush1.bf16.xpose.msra.mxu0 0
    %332 = vmatprep.subr.bf16.mxu0 0
    %333 = vmatpush1.bf16.xpose.msra.mxu0 0
    %334 = vmatprep.subr.bf16.mxu0 0
    %335 = vmatpush1.bf16.xpose.msra.mxu0 0
    %336 = vmatprep.subr.bf16.mxu0 0
    %337 = vmatpush1.bf16.xpose.msra.mxu0 0
    %338 = vmatprep.subr.bf16.mxu0 0
    %339 = vmatpush1.bf16.xpose.msra.mxu0 0
    %340 = vmatprep.mubr.bf16.mxu0 0
    %341 = vmatmul.mubr.bf16.gmra.mrb[0].mxu0 %v303
    %v342 = vpop.f32.mrb[0].mxu0
    %v343 = vadd.f32 %v115, %v342
    %v344 = vpop.f32.mrb[0].mxu0
    %v345 = vpop.f32.mrb[0].mxu0
    %v346 = vpop.f32.mrb[0].mxu0
    %347 = vdwg.mxu0
    %v348 = vsel %vm236, %v343, -inf
    %349 = vmax.xlane.f32.xlu0 %v348
    %v350 = vpop.xlane.xlu0 %349
    %v351 = vsub.f32 %v343, %v350
    %v352 = vmul.f32 %v351, 1.442695
    %v353 = vpow.pop %v352
    %v354 = vsel %vm236, %v353, 0.0
    %355 = vadd.xlane.f32.xlu0 %v354
    %v356 = vpop.xlane.xlu0 %355
    %v357 = vrcp.pop %v356
    %v358 = vmul.f32 %v353, %v357
    %v359 = vpack.c.bf16 %v358, %v358
    %360 = vrot.lane.b32.xlu0 %v185, 48
    %v361 = vpop.permute.xlu0 %360
    %v363 = vsel %vm236, %v359, 0
    %v366 = vsel %vm254, %v361, 0
    %368 = vmatprep.subr.bf16.mxu0 0
    %369 = vmatpush1.bf16.msra.mxu0 %v366
    %370 = vmatprep.subr.bf16.mxu0 0
    %371 = vmatpush1.bf16.msra.mxu0 0
    %372 = vmatprep.subr.bf16.mxu0 0
    %373 = vmatpush1.bf16.msra.mxu0 0
    %374 = vmatprep.subr.bf16.mxu0 0
    %375 = vmatpush1.bf16.msra.mxu0 0
    %376 = vmatprep.subr.bf16.mxu0 0
    %377 = vmatpush1.bf16.msra.mxu0 0
    %378 = vmatprep.subr.bf16.mxu0 0
    %379 = vmatpush1.bf16.msra.mxu0 0
    %380 = vmatprep.subr.bf16.mxu0 0
    %381 = vmatpush1.bf16.msra.mxu0 0
    %382 = vmatprep.subr.bf16.mxu0 0
    %383 = vmatpush1.bf16.msra.mxu0 0
    %384 = vmatprep.subr.bf16.mxu0 0
    %385 = vmatpush1.bf16.msra.mxu0 0
    %386 = vmatprep.subr.bf16.mxu0 0
    %387 = vmatpush1.bf16.msra.mxu0 0
    %388 = vmatprep.subr.bf16.mxu0 0
    %389 = vmatpush1.bf16.msra.mxu0 0
    %390 = vmatprep.subr.bf16.mxu0 0
    %391 = vmatpush1.bf16.msra.mxu0 0
    %392 = vmatprep.subr.bf16.mxu0 0
    %393 = vmatpush1.bf16.msra.mxu0 0
    %394 = vmatprep.subr.bf16.mxu0 0
    %395 = vmatpush1.bf16.msra.mxu0 0
    %396 = vmatprep.subr.bf16.mxu0 0
    %397 = vmatpush1.bf16.msra.mxu0 0
    %398 = vmatprep.subr.bf16.mxu0 0
    %399 = vmatpush1.bf16.msra.mxu0 0
    %400 = vmatprep.mubr.bf16.mxu0 0
    %401 = vmatmul.mubr.bf16.gmra.mrb[0].mxu0 %v363
    %v402 = vpop.f32.mrb[0].mxu0
    %v403 = vadd.f32 0.0, %v402
    %v404 = vpop.f32.mrb[0].mxu0
    %v405 = vpop.f32.mrb[0].mxu0
    %v406 = vpop.f32.mrb[0].mxu0
    %407 = vdwg.mxu0
    %409 = vrot.lane.b32.xlu0 %v403, 16
    %v410 = vpop.permute.xlu0 %409
    %v412 = vsel %vm189, %v293, %v410
    %v413 = vrot.slane %v185, 4
    %414 = vrot.lane.b32.xlu0 %v413, 96
    %v415 = vpop.permute.xlu0 %414
    %v417 = vsel %vm189, %v413, 0
    %v420 = vsel %vm189, %v415, 0
    %422 = vmatprep.subr.bf16.mxu0 0
    %423 = vmatpush1.bf16.xpose.msra.mxu0 %v420
    %424 = vmatprep.subr.bf16.mxu0 0
    %425 = vmatpush1.bf16.xpose.msra.mxu0 0
    %426 = vmatprep.subr.bf16.mxu0 0
    %427 = vmatpush1.bf16.xpose.msra.mxu0 0
    %428 = vmatprep.subr.bf16.mxu0 0
    %429 = vmatpush1.bf16.xpose.msra.mxu0 0
    %430 = vmatprep.subr.bf16.mxu0 0
    %431 = vmatpush1.bf16.xpose.msra.mxu0 0
    %432 = vmatprep.subr.bf16.mxu0 0
    %433 = vmatpush1.bf16.xpose.msra.mxu0 0
    %434 = vmatprep.subr.bf16.mxu0 0
    %435 = vmatpush1.bf16.xpose.msra.mxu0 0
    %436 = vmatprep.subr.bf16.mxu0 0
    %437 = vmatpush1.bf16.xpose.msra.mxu0 0
    %438 = vmatprep.subr.bf16.mxu0 0
    %439 = vmatpush1.bf16.xpose.msra.mxu0 0
    %440 = vmatprep.subr.bf16.mxu0 0
    %441 = vmatpush1.bf16.xpose.msra.mxu0 0
    %442 = vmatprep.subr.bf16.mxu0 0
    %443 = vmatpush1.bf16.xpose.msra.mxu0 0
    %444 = vmatprep.subr.bf16.mxu0 0
    %445 = vmatpush1.bf16.xpose.msra.mxu0 0
    %446 = vmatprep.subr.bf16.mxu0 0
    %447 = vmatpush1.bf16.xpose.msra.mxu0 0
    %448 = vmatprep.subr.bf16.mxu0 0
    %449 = vmatpush1.bf16.xpose.msra.mxu0 0
    %450 = vmatprep.subr.bf16.mxu0 0
    %451 = vmatpush1.bf16.xpose.msra.mxu0 0
    %452 = vmatprep.subr.bf16.mxu0 0
    %453 = vmatpush1.bf16.xpose.msra.mxu0 0
    %454 = vmatprep.mubr.bf16.mxu0 0
    %455 = vmatmul.mubr.bf16.gmra.mrb[0].mxu0 %v417
    %v456 = vpop.f32.mrb[0].mxu0
    %v457 = vadd.f32 %v116, %v456
    %v458 = vpop.f32.mrb[0].mxu0
    %v459 = vpop.f32.mrb[0].mxu0
    %v460 = vpop.f32.mrb[0].mxu0
    %461 = vdwg.mxu0
    %v462 = vsel %vm236, %v457, -inf
    %463 = vmax.xlane.f32.xlu0 %v462
    %v464 = vpop.xlane.xlu0 %463
    %v465 = vsub.f32 %v457, %v464
    %v466 = vmul.f32 %v465, 1.442695
    %v467 = vpow.pop %v466
    %v468 = vsel %vm236, %v467, 0.0
    %469 = vadd.xlane.f32.xlu0 %v468
    %v470 = vpop.xlane.xlu0 %469
    %v471 = vrcp.pop %v470
    %v472 = vmul.f32 %v467, %v471
    %v473 = vpack.c.bf16 %v472, %v472
    %474 = vrot.lane.b32.xlu0 %v413, 64
    %v475 = vpop.permute.xlu0 %474
    %v477 = vsel %vm236, %v473, 0
    %v480 = vsel %vm254, %v475, 0
    %482 = vmatprep.subr.bf16.mxu0 0
    %483 = vmatpush1.bf16.msra.mxu0 %v480
    %484 = vmatprep.subr.bf16.mxu0 0
    %485 = vmatpush1.bf16.msra.mxu0 0
    %486 = vmatprep.subr.bf16.mxu0 0
    %487 = vmatpush1.bf16.msra.mxu0 0
    %488 = vmatprep.subr.bf16.mxu0 0
    %489 = vmatpush1.bf16.msra.mxu0 0
    %490 = vmatprep.subr.bf16.mxu0 0
    %491 = vmatpush1.bf16.msra.mxu0 0
    %492 = vmatprep.subr.bf16.mxu0 0
    %493 = vmatpush1.bf16.msra.mxu0 0
    %494 = vmatprep.subr.bf16.mxu0 0
    %495 = vmatpush1.bf16.msra.mxu0 0
    %496 = vmatprep.subr.bf16.mxu0 0
    %497 = vmatpush1.bf16.msra.mxu0 0
    %498 = vmatprep.subr.bf16.mxu0 0
    %499 = vmatpush1.bf16.msra.mxu0 0
    %500 = vmatprep.subr.bf16.mxu0 0
    %501 = vmatpush1.bf16.msra.mxu0 0
    %502 = vmatprep.subr.bf16.mxu0 0
    %503 = vmatpush1.bf16.msra.mxu0 0
    %504 = vmatprep.subr.bf16.mxu0 0
    %505 = vmatpush1.bf16.msra.mxu0 0
    %506 = vmatprep.subr.bf16.mxu0 0
    %507 = vmatpush1.bf16.msra.mxu0 0
    %508 = vmatprep.subr.bf16.mxu0 0
    %509 = vmatpush1.bf16.msra.mxu0 0
    %510 = vmatprep.subr.bf16.mxu0 0
    %511 = vmatpush1.bf16.msra.mxu0 0
    %512 = vmatprep.subr.bf16.mxu0 0
    %513 = vmatpush1.bf16.msra.mxu0 0
    %514 = vmatprep.mubr.bf16.mxu0 0
    %515 = vmatmul.mubr.bf16.gmra.mrb[0].mxu0 %v477
    %v516 = vpop.f32.mrb[0].mxu0
    %v517 = vadd.f32 0.0, %v516
    %v518 = vpop.f32.mrb[0].mxu0
    %v519 = vpop.f32.mrb[0].mxu0
    %v520 = vpop.f32.mrb[0].mxu0
    %521 = vdwg.mxu0
    %522 = vrot.lane.b32.xlu0 %v413, 112
    %v523 = vpop.permute.xlu0 %522
    %524 = vrot.lane.b32.xlu0 %v413, 80
    %v525 = vpop.permute.xlu0 %524
    %v527 = vsel %vm189, %v523, 0
    %v530 = vsel %vm189, %v525, 0
    %532 = vmatprep.subr.bf16.mxu0 0
    %533 = vmatpush1.bf16.xpose.msra.mxu0 %v530
    %534 = vmatprep.subr.bf16.mxu0 0
    %535 = vmatpush1.bf16.xpose.msra.mxu0 0
    %536 = vmatprep.subr.bf16.mxu0 0
    %537 = vmatpush1.bf16.xpose.msra.mxu0 0
    %538 = vmatprep.subr.bf16.mxu0 0
    %539 = vmatpush1.bf16.xpose.msra.mxu0 0
    %540 = vmatprep.subr.bf16.mxu0 0
    %541 = vmatpush1.bf16.xpose.msra.mxu0 0
    %542 = vmatprep.subr.bf16.mxu0 0
    %543 = vmatpush1.bf16.xpose.msra.mxu0 0
    %544 = vmatprep.subr.bf16.mxu0 0
    %545 = vmatpush1.bf16.xpose.msra.mxu0 0
    %546 = vmatprep.subr.bf16.mxu0 0
    %547 = vmatpush1.bf16.xpose.msra.mxu0 0
    %548 = vmatprep.subr.bf16.mxu0 0
    %549 = vmatpush1.bf16.xpose.msra.mxu0 0
    %550 = vmatprep.subr.bf16.mxu0 0
    %551 = vmatpush1.bf16.xpose.msra.mxu0 0
    %552 = vmatprep.subr.bf16.mxu0 0
    %553 = vmatpush1.bf16.xpose.msra.mxu0 0
    %554 = vmatprep.subr.bf16.mxu0 0
    %555 = vmatpush1.bf16.xpose.msra.mxu0 0
    %556 = vmatprep.subr.bf16.mxu0 0
    %557 = vmatpush1.bf16.xpose.msra.mxu0 0
    %558 = vmatprep.subr.bf16.mxu0 0
    %559 = vmatpush1.bf16.xpose.msra.mxu0 0
    %560 = vmatprep.subr.bf16.mxu0 0
    %561 = vmatpush1.bf16.xpose.msra.mxu0 0
    %562 = vmatprep.subr.bf16.mxu0 0
    %563 = vmatpush1.bf16.xpose.msra.mxu0 0
    %564 = vmatprep.mubr.bf16.mxu0 0
    %565 = vmatmul.mubr.bf16.gmra.mrb[0].mxu0 %v527
    %v566 = vpop.f32.mrb[0].mxu0
    %v567 = vadd.f32 %v116, %v566
    %v568 = vpop.f32.mrb[0].mxu0
    %v569 = vpop.f32.mrb[0].mxu0
    %v570 = vpop.f32.mrb[0].mxu0
    %571 = vdwg.mxu0
    %v572 = vsel %vm236, %v567, -inf
    %573 = vmax.xlane.f32.xlu0 %v572
    %v574 = vpop.xlane.xlu0 %573
    %v575 = vsub.f32 %v567, %v574
    %v576 = vmul.f32 %v575, 1.442695
    %v577 = vpow.pop %v576
    %v578 = vsel %vm236, %v577, 0.0
    %579 = vadd.xlane.f32.xlu0 %v578
    %v580 = vpop.xlane.xlu0 %579
    %v581 = vrcp.pop %v580
    %v582 = vmul.f32 %v577, %v581
    %v583 = vpack.c.bf16 %v582, %v582
    %584 = vrot.lane.b32.xlu0 %v413, 48
    %v585 = vpop.permute.xlu0 %584
    %v587 = vsel %vm236, %v583, 0
    %v590 = vsel %vm254, %v585, 0
    %592 = vmatprep.subr.bf16.mxu0 0
    %593 = vmatpush1.bf16.msra.mxu0 %v590
    %594 = vmatprep.subr.bf16.mxu0 0
    %595 = vmatpush1.bf16.msra.mxu0 0
    %596 = vmatprep.subr.bf16.mxu0 0
    %597 = vmatpush1.bf16.msra.mxu0 0
    %598 = vmatprep.subr.bf16.mxu0 0
    %599 = vmatpush1.bf16.msra.mxu0 0
    %600 = vmatprep.subr.bf16.mxu0 0
    %601 = vmatpush1.bf16.msra.mxu0 0
    %602 = vmatprep.subr.bf16.mxu0 0
    %603 = vmatpush1.bf16.msra.mxu0 0
    %604 = vmatprep.subr.bf16.mxu0 0
    %605 = vmatpush1.bf16.msra.mxu0 0
    %606 = vmatprep.subr.bf16.mxu0 0
    %607 = vmatpush1.bf16.msra.mxu0 0
    %608 = vmatprep.subr.bf16.mxu0 0
    %609 = vmatpush1.bf16.msra.mxu0 0
    %610 = vmatprep.subr.bf16.mxu0 0
    %611 = vmatpush1.bf16.msra.mxu0 0
    %612 = vmatprep.subr.bf16.mxu0 0
    %613 = vmatpush1.bf16.msra.mxu0 0
    %614 = vmatprep.subr.bf16.mxu0 0
    %615 = vmatpush1.bf16.msra.mxu0 0
    %616 = vmatprep.subr.bf16.mxu0 0
    %617 = vmatpush1.bf16.msra.mxu0 0
    %618 = vmatprep.subr.bf16.mxu0 0
    %619 = vmatpush1.bf16.msra.mxu0 0
    %620 = vmatprep.subr.bf16.mxu0 0
    %621 = vmatpush1.bf16.msra.mxu0 0
    %622 = vmatprep.subr.bf16.mxu0 0
    %623 = vmatpush1.bf16.msra.mxu0 0
    %624 = vmatprep.mubr.bf16.mxu0 0
    %625 = vmatmul.mubr.bf16.gmra.mrb[0].mxu0 %v587
    %v626 = vpop.f32.mrb[0].mxu0
    %v627 = vadd.f32 0.0, %v626
    %v628 = vpop.f32.mrb[0].mxu0
    %v629 = vpop.f32.mrb[0].mxu0
    %v630 = vpop.f32.mrb[0].mxu0
    %631 = vdwg.mxu0
    %633 = vrot.lane.b32.xlu0 %v627, 16
    %v634 = vpop.permute.xlu0 %633
    %v636 = vsel %vm189, %v517, %v634
    %v637 = vpack.c.bf16 %v636, %v412
    %v638 = vld [vmem:[%s6] sm:$0xf]
    %v639 = vld [vmem:[%s6 + $0x4] sm:$0xf]
    %v640 = vld [vmem:[%s6 + $0x8] sm:$0xf]
    %v641 = vld [vmem:[%s6 + $0xc] sm:$0xf]
    %v642 = vld [vmem:[%s7] sm:$0x1]
    %v644 = vlaneseq
    %v645 = vshrl.u32 %v644, 7
    %v646 = vsub.s32 0, %v645
    %v647 = vrot.slane %v642, %v646
    %v653 = vunpack.c.l.b16 %v638
    %v654 = vunpack.c.l.b16 %v639
    %v655 = vunpack.c.l.b16 %v640
    %v656 = vunpack.c.l.b16 %v641
    %v657 = vpack.c.b16 %v654, %v653
    %v658 = vpack.c.b16 %v656, %v655
    %v662 = vsel %vm71, %v637, 0
    %664 = vmatprep.subr.bf16.mxu0 0
    %665 = vmatpush1.bf16.msra.mxu0 %v657
    %666 = vmatprep.subr.bf16.mxu0 0
    %667 = vmatpush1.bf16.msra.mxu0 %v658
    %668 = vmatprep.subr.bf16.mxu0 0
    %669 = vmatpush1.bf16.msra.mxu0 0
    %670 = vmatprep.subr.bf16.mxu0 0
    %671 = vmatpush1.bf16.msra.mxu0 0
    %672 = vmatprep.subr.bf16.mxu0 0
    %673 = vmatpush1.bf16.msra.mxu0 0
    %674 = vmatprep.subr.bf16.mxu0 0
    %675 = vmatpush1.bf16.msra.mxu0 0
    %676 = vmatprep.subr.bf16.mxu0 0
    %677 = vmatpush1.bf16.msra.mxu0 0
    %678 = vmatprep.subr.bf16.mxu0 0
    %679 = vmatpush1.bf16.msra.mxu0 0
    %680 = vmatprep.subr.bf16.mxu0 0
    %681 = vmatpush1.bf16.msra.mxu0 0
    %682 = vmatprep.subr.bf16.mxu0 0
    %683 = vmatpush1.bf16.msra.mxu0 0
    %684 = vmatprep.subr.bf16.mxu0 0
    %685 = vmatpush1.bf16.msra.mxu0 0
    %686 = vmatprep.subr.bf16.mxu0 0
    %687 = vmatpush1.bf16.msra.mxu0 0
    %688 = vmatprep.subr.bf16.mxu0 0
    %689 = vmatpush1.bf16.msra.mxu0 0
    %690 = vmatprep.subr.bf16.mxu0 0
    %691 = vmatpush1.bf16.msra.mxu0 0
    %692 = vmatprep.subr.bf16.mxu0 0
    %693 = vmatpush1.bf16.msra.mxu0 0
    %694 = vmatprep.subr.bf16.mxu0 0
    %695 = vmatpush1.bf16.msra.mxu0 0
    %696 = vmatprep.mubr.bf16.mxu0 0
    %697 = vmatmul.mubr.bf16.gmra.mrb[0].mxu0 %v662
    %v698 = vpop.f32.mrb[0].mxu0
    %v699 = vadd.f32 %v647, %v698
    %v700 = vpop.f32.mrb[0].mxu0
    %v701 = vpop.f32.mrb[0].mxu0
    %v702 = vadd.f32 %v647, %v701
    %v703 = vpop.f32.mrb[0].mxu0
    %704 = vdwg.mxu0
    %v705 = vadd.f32 %v699, %v113
    %v706 = vadd.f32 %v702, %v114
    %v707 = vld [vmem:[%s8] sm:$0x1]
    %v708 = vld [vmem:[%s9] sm:$0x1]
    %v709 = vsel %vm71, %v705, 0.0
    %710 = vadd.xlane.f32.xlu0 %v709
    %v711 = vpop.xlane.xlu0 %710
    %v712 = vsel %vm71, %v706, 0.0
    %713 = vadd.xlane.f32.xlu0 %v712
    %v714 = vpop.xlane.xlu0 %713
    %v715 = vmul.f32 %v711, %v78
    %v716 = vmul.f32 %v714, %v78
    %v717 = vsub.f32 %v705, %v715
    %v718 = vsub.f32 %v706, %v716
    %v719 = vmul.f32 %v717, %v717
    %v720 = vmul.f32 %v718, %v718
    %v721 = vsel %vm71, %v719, 0.0
    %722 = vadd.xlane.f32.xlu0 %v721
    %v723 = vpop.xlane.xlu0 %722
    %v724 = vsel %vm71, %v720, 0.0
    %725 = vadd.xlane.f32.xlu0 %v724
    %v726 = vpop.xlane.xlu0 %725
    %v727 = vmul.f32 %v723, %v78
    %v728 = vmul.f32 %v726, %v78
    %v729 = vadd.f32 %v727, 1e-12
    %v730 = vadd.f32 %v728, 1e-12
    %v731 = vrsqrt.pop %v729
    %v732 = vrsqrt.pop %v730
    %v733 = vmul.f32 %v717, %v731
    %v734 = vmul.f32 %v718, %v732
    %v736 = vlaneseq
    %v737 = vshrl.u32 %v736, 7
    %v738 = vsub.s32 0, %v737
    %v739 = vrot.slane %v707, %v738
    %v741 = vmul.f32 %v733, %v739
    %v742 = vmul.f32 %v734, %v739
    %v744 = vlaneseq
    %v745 = vshrl.u32 %v744, 7
    %v746 = vsub.s32 0, %v745
    %v747 = vrot.slane %v708, %v746
    %v749 = vadd.f32 %v741, %v747
    %v750 = vadd.f32 %v742, %v747
    %v751 = vpack.c.bf16 %v750, %v749
    %v752 = vld [vmem:[%s10] sm:$0xf]
    %v753 = vld [vmem:[%s10 + $0x4] sm:$0xf]
    %v754 = vld [vmem:[%s10 + $0x8] sm:$0xf]
    %v755 = vld [vmem:[%s10 + $0xc] sm:$0xf]
    %v756 = vld [vmem:[%s11] sm:$0x1]
    %v758 = vlaneseq
    %v759 = vshrl.u32 %v758, 7
    %v760 = vsub.s32 0, %v759
    %v761 = vrot.slane %v756, %v760
    %v767 = vunpack.c.l.b16 %v752
    %v768 = vunpack.c.l.b16 %v753
    %v769 = vunpack.c.l.b16 %v754
    %v770 = vunpack.c.l.b16 %v755
    %v771 = vpack.c.b16 %v768, %v767
    %v772 = vpack.c.b16 %v770, %v769
    %v776 = vsel %vm71, %v751, 0
    %778 = vmatprep.subr.bf16.mxu0 0
    %779 = vmatpush1.bf16.msra.mxu0 %v771
    %780 = vmatprep.subr.bf16.mxu0 0
    %781 = vmatpush1.bf16.msra.mxu0 %v772
    %782 = vmatprep.subr.bf16.mxu0 0
    %783 = vmatpush1.bf16.msra.mxu0 0
    %784 = vmatprep.subr.bf16.mxu0 0
    %785 = vmatpush1.bf16.msra.mxu0 0
    %786 = vmatprep.subr.bf16.mxu0 0
    %787 = vmatpush1.bf16.msra.mxu0 0
    %788 = vmatprep.subr.bf16.mxu0 0
    %789 = vmatpush1.bf16.msra.mxu0 0
    %790 = vmatprep.subr.bf16.mxu0 0
    %791 = vmatpush1.bf16.msra.mxu0 0
    %792 = vmatprep.subr.bf16.mxu0 0
    %793 = vmatpush1.bf16.msra.mxu0 0
    %794 = vmatprep.subr.bf16.mxu0 0
    %795 = vmatpush1.bf16.msra.mxu0 0
    %796 = vmatprep.subr.bf16.mxu0 0
    %797 = vmatpush1.bf16.msra.mxu0 0
    %798 = vmatprep.subr.bf16.mxu0 0
    %799 = vmatpush1.bf16.msra.mxu0 0
    %800 = vmatprep.subr.bf16.mxu0 0
    %801 = vmatpush1.bf16.msra.mxu0 0
    %802 = vmatprep.subr.bf16.mxu0 0
    %803 = vmatpush1.bf16.msra.mxu0 0
    %804 = vmatprep.subr.bf16.mxu0 0
    %805 = vmatpush1.bf16.msra.mxu0 0
    %806 = vmatprep.subr.bf16.mxu0 0
    %807 = vmatpush1.bf16.msra.mxu0 0
    %808 = vmatprep.subr.bf16.mxu0 0
    %809 = vmatpush1.bf16.msra.mxu0 0
    %810 = vmatprep.mubr.bf16.mxu0 0
    %811 = vmatmul.mubr.bf16.gmra.mrb[0].mxu0 %v776
    %v812 = vpop.f32.mrb[0].mxu0
    %v813 = vadd.f32 %v761, %v812
    %v814 = vpop.f32.mrb[0].mxu0
    %v815 = vpop.f32.mrb[0].mxu0
    %v816 = vadd.f32 %v761, %v815
    %v817 = vpop.f32.mrb[0].mxu0
    %818 = vdwg.mxu0
    %v819 = vmul.f32 %v813, %v813
    %v820 = vmul.f32 %v816, %v816
    %v821 = vmul.f32 %v813, %v819
    %v822 = vmul.f32 %v816, %v820
    %v823 = vmul.f32 %v821, 0.044715
    %v824 = vmul.f32 %v822, 0.044715
    %v825 = vadd.f32 %v813, %v823
    %v826 = vadd.f32 %v816, %v824
    %v827 = vmul.f32 %v825, 0.7978846
    %v828 = vmul.f32 %v826, 0.7978846
    %v829 = vtanh.pop %v827
    %v830 = vtanh.pop %v828
    %v831 = vadd.f32 %v829, 1.0
    %v832 = vadd.f32 %v830, 1.0
    %v833 = vmul.f32 %v831, 0.5
    %v834 = vmul.f32 %v832, 0.5
    %v835 = vmul.f32 %v813, %v833
    %v836 = vmul.f32 %v816, %v834
    %v837 = vpack.c.bf16 %v836, %v835
    %v838 = vld [vmem:[%s12] sm:$0xf]
    %v839 = vld [vmem:[%s12 + $0x4] sm:$0xf]
    %v840 = vld [vmem:[%s12 + $0x8] sm:$0xf]
    %v841 = vld [vmem:[%s12 + $0xc] sm:$0xf]
    %v842 = vld [vmem:[%s12 + $0x10] sm:$0xf]
    %v843 = vld [vmem:[%s12 + $0x14] sm:$0xf]
    %v844 = vld [vmem:[%s12 + $0x18] sm:$0xf]
    %v845 = vld [vmem:[%s12 + $0x1c] sm:$0xf]
    %v846 = vld [vmem:[%s13] sm:$0x1]
    %v848 = vlaneseq
    %v849 = vshrl.u32 %v848, 7
    %v850 = vsub.s32 0, %v849
    %v851 = vrot.slane %v846, %v850
    %v861 = vunpack.c.l.b16 %v838
    %v862 = vunpack.c.l.b16 %v839
    %v863 = vunpack.c.l.b16 %v840
    %v864 = vunpack.c.l.b16 %v841
    %v865 = vunpack.c.l.b16 %v842
    %v866 = vunpack.c.l.b16 %v843
    %v867 = vunpack.c.l.b16 %v844
    %v868 = vunpack.c.l.b16 %v845
    %v869 = vpack.c.b16 %v862, %v861
    %v870 = vpack.c.b16 %v864, %v863
    %v871 = vpack.c.b16 %v866, %v865
    %v872 = vpack.c.b16 %v868, %v867
    %vm877 = vcmask 523264
    %v879 = vsel %vm877, %v837, 0
    %881 = vmatprep.subr.bf16.mxu0 0
    %882 = vmatpush1.bf16.msra.mxu0 %v869
    %883 = vmatprep.subr.bf16.mxu0 0
    %884 = vmatpush1.bf16.msra.mxu0 %v870
    %885 = vmatprep.subr.bf16.mxu0 0
    %886 = vmatpush1.bf16.msra.mxu0 %v871
    %887 = vmatprep.subr.bf16.mxu0 0
    %888 = vmatpush1.bf16.msra.mxu0 %v872
    %889 = vmatprep.subr.bf16.mxu0 0
    %890 = vmatpush1.bf16.msra.mxu0 0
    %891 = vmatprep.subr.bf16.mxu0 0
    %892 = vmatpush1.bf16.msra.mxu0 0
    %893 = vmatprep.subr.bf16.mxu0 0
    %894 = vmatpush1.bf16.msra.mxu0 0
    %895 = vmatprep.subr.bf16.mxu0 0
    %896 = vmatpush1.bf16.msra.mxu0 0
    %897 = vmatprep.subr.bf16.mxu0 0
    %898 = vmatpush1.bf16.msra.mxu0 0
    %899 = vmatprep.subr.bf16.mxu0 0
    %900 = vmatpush1.bf16.msra.mxu0 0
    %901 = vmatprep.subr.bf16.mxu0 0
    %902 = vmatpush1.bf16.msra.mxu0 0
    %903 = vmatprep.subr.bf16.mxu0 0
    %904 = vmatpush1.bf16.msra.mxu0 0
    %905 = vmatprep.subr.bf16.mxu0 0
    %906 = vmatpush1.bf16.msra.mxu0 0
    %907 = vmatprep.subr.bf16.mxu0 0
    %908 = vmatpush1.bf16.msra.mxu0 0
    %909 = vmatprep.subr.bf16.mxu0 0
    %910 = vmatpush1.bf16.msra.mxu0 0
    %911 = vmatprep.subr.bf16.mxu0 0
    %912 = vmatpush1.bf16.msra.mxu0 0
    %913 = vmatprep.mubr.bf16.mxu0 0
    %914 = vmatmul.mubr.bf16.gmra.mrb[0].mxu0 %v879
    %v915 = vpop.f32.mrb[0].mxu0
    %v916 = vadd.f32 %v851, %v915
    %v917 = vpop.f32.mrb[0].mxu0
    %v918 = vpop.f32.mrb[0].mxu0
    %v919 = vadd.f32 %v851, %v918
    %v920 = vpop.f32.mrb[0].mxu0
    %921 = vdwg.mxu0
    %v922 = vadd.f32 %v916, %v749
    %v923 = vadd.f32 %v919, %v750
    %v924 = vld [vmem:[%s14] sm:$0x1]
    %v925 = vld [vmem:[%s15] sm:$0x1]
    %v926 = vsel %vm71, %v922, 0.0
    %927 = vadd.xlane.f32.xlu0 %v926
    %v928 = vpop.xlane.xlu0 %927
    %v929 = vsel %vm71, %v923, 0.0
    %930 = vadd.xlane.f32.xlu0 %v929
    %v931 = vpop.xlane.xlu0 %930
    %v932 = vmul.f32 %v928, %v78
    %v933 = vmul.f32 %v931, %v78
    %v934 = vsub.f32 %v922, %v932
    %v935 = vsub.f32 %v923, %v933
    %v936 = vmul.f32 %v934, %v934
    %v937 = vmul.f32 %v935, %v935
    %v938 = vsel %vm71, %v936, 0.0
    %939 = vadd.xlane.f32.xlu0 %v938
    %v940 = vpop.xlane.xlu0 %939
    %v941 = vsel %vm71, %v937, 0.0
    %942 = vadd.xlane.f32.xlu0 %v941
    %v943 = vpop.xlane.xlu0 %942
    %v944 = vmul.f32 %v940, %v78
    %v945 = vmul.f32 %v943, %v78
    %v946 = vadd.f32 %v944, 1e-12
    %v947 = vadd.f32 %v945, 1e-12
    %v948 = vrsqrt.pop %v946
    %v949 = vrsqrt.pop %v947
    %v950 = vmul.f32 %v934, %v948
    %v951 = vmul.f32 %v935, %v949
    %v953 = vlaneseq
    %v954 = vshrl.u32 %v953, 7
    %v955 = vsub.s32 0, %v954
    %v956 = vrot.slane %v924, %v955
    %v958 = vmul.f32 %v950, %v956
    %v959 = vmul.f32 %v951, %v956
    %v961 = vlaneseq
    %v962 = vshrl.u32 %v961, 7
    %v963 = vsub.s32 0, %v962
    %v964 = vrot.slane %v925, %v963
    %v966 = vadd.f32 %v958, %v964
    %v967 = vadd.f32 %v959, %v964
    %v968 = vpack.c.bf16 %v967, %v966
    %s969 = scalar_lea.vmem %s4, 16
    %v970 = vld [vmem:[%s969] sm:$0xf]
    %v971 = vld [vmem:[%s969 + $0x4] sm:$0xf]
    %v972 = vld [vmem:[%s969 + $0x8] sm:$0xf]
    %v973 = vld [vmem:[%s969 + $0xc] sm:$0xf]
    %s974 = scalar_lea.vmem %s5, 1
    %v975 = vld [vmem:[%s974] sm:$0x1]
    %v977 = vlaneseq
    %v978 = vshrl.u32 %v977, 7
    %v979 = vsub.s32 0, %v978
    %v980 = vrot.slane %v975, %v979
    %v986 = vunpack.c.l.b16 %v970
    %v987 = vunpack.c.l.b16 %v971
    %v988 = vunpack.c.l.b16 %v972
    %v989 = vunpack.c.l.b16 %v973
    %v990 = vpack.c.b16 %v987, %v986
    %v991 = vpack.c.b16 %v989, %v988
    %v995 = vsel %vm71, %v968, 0
    %997 = vmatprep.subr.bf16.mxu0 0
    %998 = vmatpush1.bf16.msra.mxu0 %v990
    %999 = vmatprep.subr.bf16.mxu0 0
    %1000 = vmatpush1.bf16.msra.mxu0 %v991
    %1001 = vmatprep.subr.bf16.mxu0 0
    %1002 = vmatpush1.bf16.msra.mxu0 0
    %1003 = vmatprep.subr.bf16.mxu0 0
    %1004 = vmatpush1.bf16.msra.mxu0 0
    %1005 = vmatprep.subr.bf16.mxu0 0
    %1006 = vmatpush1.bf16.msra.mxu0 0
    %1007 = vmatprep.subr.bf16.mxu0 0
    %1008 = vmatpush1.bf16.msra.mxu0 0
    %1009 = vmatprep.subr.bf16.mxu0 0
    %1010 = vmatpush1.bf16.msra.mxu0 0
    %1011 = vmatprep.subr.bf16.mxu0 0
    %1012 = vmatpush1.bf16.msra.mxu0 0
    %1013 = vmatprep.subr.bf16.mxu0 0
    %1014 = vmatpush1.bf16.msra.mxu0 0
    %1015 = vmatprep.subr.bf16.mxu0 0
    %1016 = vmatpush1.bf16.msra.mxu0 0
    %1017 = vmatprep.subr.bf16.mxu0 0
    %1018 = vmatpush1.bf16.msra.mxu0 0
    %1019 = vmatprep.subr.bf16.mxu0 0
    %1020 = vmatpush1.bf16.msra.mxu0 0
    %1021 = vmatprep.subr.bf16.mxu0 0
    %1022 = vmatpush1.bf16.msra.mxu0 0
    %1023 = vmatprep.subr.bf16.mxu0 0
    %1024 = vmatpush1.bf16.msra.mxu0 0
    %1025 = vmatprep.subr.bf16.mxu0 0
    %1026 = vmatpush1.bf16.msra.mxu0 0
    %1027 = vmatprep.subr.bf16.mxu0 0
    %1028 = vmatpush1.bf16.msra.mxu0 0
    %1029 = vmatprep.mubr.bf16.mxu0 0
    %1030 = vmatmul.mubr.bf16.gmra.mrb[0].mxu0 %v995
    %v1031 = vpop.f32.mrb[0].mxu0
    %v1032 = vadd.f32 %v980, %v1031
    %v1033 = vpop.f32.mrb[0].mxu0
    %v1034 = vpop.f32.mrb[0].mxu0
    %v1035 = vadd.f32 %v980, %v1034
    %v1036 = vpop.f32.mrb[0].mxu0
    %1037 = vdwg.mxu0
    %v1038 = vpack.c.bf16 %v1035, %v1032
    %1040 = vrot.lane.b32.xlu0 %v1038, 96
    %v1041 = vpop.permute.xlu0 %1040
    %v1043 = vsel %vm189, %v1038, 0
    %v1046 = vsel %vm189, %v1041, 0
    %1048 = vmatprep.subr.bf16.mxu0 0
    %1049 = vmatpush1.bf16.xpose.msra.mxu0 %v1046
    %1050 = vmatprep.subr.bf16.mxu0 0
    %1051 = vmatpush1.bf16.xpose.msra.mxu0 0
    %1052 = vmatprep.subr.bf16.mxu0 0
    %1053 = vmatpush1.bf16.xpose.msra.mxu0 0
    %1054 = vmatprep.subr.bf16.mxu0 0
    %1055 = vmatpush1.bf16.xpose.msra.mxu0 0
    %1056 = vmatprep.subr.bf16.mxu0 0
    %1057 = vmatpush1.bf16.xpose.msra.mxu0 0
    %1058 = vmatprep.subr.bf16.mxu0 0
    %1059 = vmatpush1.bf16.xpose.msra.mxu0 0
    %1060 = vmatprep.subr.bf16.mxu0 0
    %1061 = vmatpush1.bf16.xpose.msra.mxu0 0
    %1062 = vmatprep.subr.bf16.mxu0 0
    %1063 = vmatpush1.bf16.xpose.msra.mxu0 0
    %1064 = vmatprep.subr.bf16.mxu0 0
    %1065 = vmatpush1.bf16.xpose.msra.mxu0 0
    %1066 = vmatprep.subr.bf16.mxu0 0
    %1067 = vmatpush1.bf16.xpose.msra.mxu0 0
    %1068 = vmatprep.subr.bf16.mxu0 0
    %1069 = vmatpush1.bf16.xpose.msra.mxu0 0
    %1070 = vmatprep.subr.bf16.mxu0 0
    %1071 = vmatpush1.bf16.xpose.msra.mxu0 0
    %1072 = vmatprep.subr.bf16.mxu0 0
    %1073 = vmatpush1.bf16.xpose.msra.mxu0 0
    %1074 = vmatprep.subr.bf16.mxu0 0
    %1075 = vmatpush1.bf16.xpose.msra.mxu0 0
    %1076 = vmatprep.subr.bf16.mxu0 0
    %1077 = vmatpush1.bf16.xpose.msra.mxu0 0
    %1078 = vmatprep.subr.bf16.mxu0 0
    %1079 = vmatpush1.bf16.xpose.msra.mxu0 0
    %1080 = vmatprep.mubr.bf16.mxu0 0
    %1081 = vmatmul.mubr.bf16.gmra.mrb[0].mxu0 %v1043
    %v1082 = vpop.f32.mrb[0].mxu0
    %v1083 = vadd.f32 %v115, %v1082
    %v1084 = vpop.f32.mrb[0].mxu0
    %v1085 = vpop.f32.mrb[0].mxu0
    %v1086 = vpop.f32.mrb[0].mxu0
    %1087 = vdwg.mxu0
    %v1088 = vsel %vm236, %v1083, -inf
    %1089 = vmax.xlane.f32.xlu0 %v1088
    %v1090 = vpop.xlane.xlu0 %1089
    %v1091 = vsub.f32 %v1083, %v1090
    %v1092 = vmul.f32 %v1091, 1.442695
    %v1093 = vpow.pop %v1092
    %v1094 = vsel %vm236, %v1093, 0.0
    %1095 = vadd.xlane.f32.xlu0 %v1094
    %v1096 = vpop.xlane.xlu0 %1095
    %v1097 = vrcp.pop %v1096
    %v1098 = vmul.f32 %v1093, %v1097
    %v1099 = vpack.c.bf16 %v1098, %v1098
    %1100 = vrot.lane.b32.xlu0 %v1038, 64
    %v1101 = vpop.permute.xlu0 %1100
    %v1103 = vsel %vm236, %v1099, 0
    %v1106 = vsel %vm254, %v1101, 0
    %1108 = vmatprep.subr.bf16.mxu0 0
    %1109 = vmatpush1.bf16.msra.mxu0 %v1106
    %1110 = vmatprep.subr.bf16.mxu0 0
    %1111 = vmatpush1.bf16.msra.mxu0 0
    %1112 = vmatprep.subr.bf16.mxu0 0
    %1113 = vmatpush1.bf16.msra.mxu0 0
    %1114 = vmatprep.subr.bf16.mxu0 0
    %1115 = vmatpush1.bf16.msra.mxu0 0
    %1116 = vmatprep.subr.bf16.mxu0 0
    %1117 = vmatpush1.bf16.msra.mxu0 0
    %1118 = vmatprep.subr.bf16.mxu0 0
    %1119 = vmatpush1.bf16.msra.mxu0 0
    %1120 = vmatprep.subr.bf16.mxu0 0
    %1121 = vmatpush1.bf16.msra.mxu0 0
    %1122 = vmatprep.subr.bf16.mxu0 0
    %1123 = vmatpush1.bf16.msra.mxu0 0
    %1124 = vmatprep.subr.bf16.mxu0 0
    %1125 = vmatpush1.bf16.msra.mxu0 0
    %1126 = vmatprep.subr.bf16.mxu0 0
    %1127 = vmatpush1.bf16.msra.mxu0 0
    %1128 = vmatprep.subr.bf16.mxu0 0
    %1129 = vmatpush1.bf16.msra.mxu0 0
    %1130 = vmatprep.subr.bf16.mxu0 0
    %1131 = vmatpush1.bf16.msra.mxu0 0
    %1132 = vmatprep.subr.bf16.mxu0 0
    %1133 = vmatpush1.bf16.msra.mxu0 0
    %1134 = vmatprep.subr.bf16.mxu0 0
    %1135 = vmatpush1.bf16.msra.mxu0 0
    %1136 = vmatprep.subr.bf16.mxu0 0
    %1137 = vmatpush1.bf16.msra.mxu0 0
    %1138 = vmatprep.subr.bf16.mxu0 0
    %1139 = vmatpush1.bf16.msra.mxu0 0
    %1140 = vmatprep.mubr.bf16.mxu0 0
    %1141 = vmatmul.mubr.bf16.gmra.mrb[0].mxu0 %v1103
    %v1142 = vpop.f32.mrb[0].mxu0
    %v1143 = vadd.f32 0.0, %v1142
    %v1144 = vpop.f32.mrb[0].mxu0
    %v1145 = vpop.f32.mrb[0].mxu0
    %v1146 = vpop.f32.mrb[0].mxu0
    %1147 = vdwg.mxu0
    %1148 = vrot.lane.b32.xlu0 %v1038, 112
    %v1149 = vpop.permute.xlu0 %1148
    %1150 = vrot.lane.b32.xlu0 %v1038, 80
    %v1151 = vpop.permute.xlu0 %1150
    %v1153 = vsel %vm189, %v1149, 0
    %v1156 = vsel %vm189, %v1151, 0
    %1158 = vmatprep.subr.bf16.mxu0 0
    %1159 = vmatpush1.bf16.xpose.msra.mxu0 %v1156
    %1160 = vmatprep.subr.bf16.mxu0 0
    %1161 = vmatpush1.bf16.xpose.msra.mxu0 0
    %1162 = vmatprep.subr.bf16.mxu0 0
    %1163 = vmatpush1.bf16.xpose.msra.mxu0 0
    %1164 = vmatprep.subr.bf16.mxu0 0
    %1165 = vmatpush1.bf16.xpose.msra.mxu0 0
    %1166 = vmatprep.subr.bf16.mxu0 0
    %1167 = vmatpush1.bf16.xpose.msra.mxu0 0
    %1168 = vmatprep.subr.bf16.mxu0 0
    %1169 = vmatpush1.bf16.xpose.msra.mxu0 0
    %1170 = vmatprep.subr.bf16.mxu0 0
    %1171 = vmatpush1.bf16.xpose.msra.mxu0 0
    %1172 = vmatprep.subr.bf16.mxu0 0
    %1173 = vmatpush1.bf16.xpose.msra.mxu0 0
    %1174 = vmatprep.subr.bf16.mxu0 0
    %1175 = vmatpush1.bf16.xpose.msra.mxu0 0
    %1176 = vmatprep.subr.bf16.mxu0 0
    %1177 = vmatpush1.bf16.xpose.msra.mxu0 0
    %1178 = vmatprep.subr.bf16.mxu0 0
    %1179 = vmatpush1.bf16.xpose.msra.mxu0 0
    %1180 = vmatprep.subr.bf16.mxu0 0
    %1181 = vmatpush1.bf16.xpose.msra.mxu0 0
    %1182 = vmatprep.subr.bf16.mxu0 0
    %1183 = vmatpush1.bf16.xpose.msra.mxu0 0
    %1184 = vmatprep.subr.bf16.mxu0 0
    %1185 = vmatpush1.bf16.xpose.msra.mxu0 0
    %1186 = vmatprep.subr.bf16.mxu0 0
    %1187 = vmatpush1.bf16.xpose.msra.mxu0 0
    %1188 = vmatprep.subr.bf16.mxu0 0
    %1189 = vmatpush1.bf16.xpose.msra.mxu0 0
    %1190 = vmatprep.mubr.bf16.mxu0 0
    %1191 = vmatmul.mubr.bf16.gmra.mrb[0].mxu0 %v1153
    %v1192 = vpop.f32.mrb[0].mxu0
    %v1193 = vadd.f32 %v115, %v1192
    %v1194 = vpop.f32.mrb[0].mxu0
    %v1195 = vpop.f32.mrb[0].mxu0
    %v1196 = vpop.f32.mrb[0].mxu0
    %1197 = vdwg.mxu0
    %v1198 = vsel %vm236, %v1193, -inf
    %1199 = vmax.xlane.f32.xlu0 %v1198
    %v1200 = vpop.xlane.xlu0 %1199
    %v1201 = vsub.f32 %v1193, %v1200
    %v1202 = vmul.f32 %v1201, 1.442695
    %v1203 = vpow.pop %v1202
    %v1204 = vsel %vm236, %v1203, 0.0
    %1205 = vadd.xlane.f32.xlu0 %v1204
    %v1206 = vpop.xlane.xlu0 %1205
    %v1207 = vrcp.pop %v1206
    %v1208 = vmul.f32 %v1203, %v1207
    %v1209 = vpack.c.bf16 %v1208, %v1208
    %1210 = vrot.lane.b32.xlu0 %v1038, 48
    %v1211 = vpop.permute.xlu0 %1210
    %v1213 = vsel %vm236, %v1209, 0
    %v1216 = vsel %vm254, %v1211, 0
    %1218 = vmatprep.subr.bf16.mxu0 0
    %1219 = vmatpush1.bf16.msra.mxu0 %v1216
    %1220 = vmatprep.subr.bf16.mxu0 0
    %1221 = vmatpush1.bf16.msra.mxu0 0
    %1222 = vmatprep.subr.bf16.mxu0 0
    %1223 = vmatpush1.bf16.msra.mxu0 0
    %1224 = vmatprep.subr.bf16.mxu0 0
    %1225 = vmatpush1.bf16.msra.mxu0 0
    %1226 = vmatprep.subr.bf16.mxu0 0
    %1227 = vmatpush1.bf16.msra.mxu0 0
    %1228 = vmatprep.subr.bf16.mxu0 0
    %1229 = vmatpush1.bf16.msra.mxu0 0
    %1230 = vmatprep.subr.bf16.mxu0 0
    %1231 = vmatpush1.bf16.msra.mxu0 0
    %1232 = vmatprep.subr.bf16.mxu0 0
    %1233 = vmatpush1.bf16.msra.mxu0 0
    %1234 = vmatprep.subr.bf16.mxu0 0
    %1235 = vmatpush1.bf16.msra.mxu0 0
    %1236 = vmatprep.subr.bf16.mxu0 0
    %1237 = vmatpush1.bf16.msra.mxu0 0
    %1238 = vmatprep.subr.bf16.mxu0 0
    %1239 = vmatpush1.bf16.msra.mxu0 0
    %1240 = vmatprep.subr.bf16.mxu0 0
    %1241 = vmatpush1.bf16.msra.mxu0 0
    %1242 = vmatprep.subr.bf16.mxu0 0
    %1243 = vmatpush1.bf16.msra.mxu0 0
    %1244 = vmatprep.subr.bf16.mxu0 0
    %1245 = vmatpush1.bf16.msra.mxu0 0
    %1246 = vmatprep.subr.bf16.mxu0 0
    %1247 = vmatpush1.bf16.msra.mxu0 0
    %1248 = vmatprep.subr.bf16.mxu0 0
    %1249 = vmatpush1.bf16.msra.mxu0 0
    %1250 = vmatprep.mubr.bf16.mxu0 0
    %1251 = vmatmul.mubr.bf16.gmra.mrb[0].mxu0 %v1213
    %v1252 = vpop.f32.mrb[0].mxu0
    %v1253 = vadd.f32 0.0, %v1252
    %v1254 = vpop.f32.mrb[0].mxu0
    %v1255 = vpop.f32.mrb[0].mxu0
    %v1256 = vpop.f32.mrb[0].mxu0
    %1257 = vdwg.mxu0
    %1259 = vrot.lane.b32.xlu0 %v1253, 16
    %v1260 = vpop.permute.xlu0 %1259
    %v1262 = vsel %vm189, %v1143, %v1260
    %v1263 = vrot.slane %v1038, 4
    %1264 = vrot.lane.b32.xlu0 %v1263, 96
    %v1265 = vpop.permute.xlu0 %1264
    %v1267 = vsel %vm189, %v1263, 0
    %v1270 = vsel %vm189, %v1265, 0
    %1272 = vmatprep.subr.bf16.mxu0 0
    %1273 = vmatpush1.bf16.xpose.msra.mxu0 %v1270
    %1274 = vmatprep.subr.bf16.mxu0 0
    %1275 = vmatpush1.bf16.xpose.msra.mxu0 0
    %1276 = vmatprep.subr.bf16.mxu0 0
    %1277 = vmatpush1.bf16.xpose.msra.mxu0 0
    %1278 = vmatprep.subr.bf16.mxu0 0
    %1279 = vmatpush1.bf16.xpose.msra.mxu0 0
    %1280 = vmatprep.subr.bf16.mxu0 0
    %1281 = vmatpush1.bf16.xpose.msra.mxu0 0
    %1282 = vmatprep.subr.bf16.mxu0 0
    %1283 = vmatpush1.bf16.xpose.msra.mxu0 0
    %1284 = vmatprep.subr.bf16.mxu0 0
    %1285 = vmatpush1.bf16.xpose.msra.mxu0 0
    %1286 = vmatprep.subr.bf16.mxu0 0
    %1287 = vmatpush1.bf16.xpose.msra.mxu0 0
    %1288 = vmatprep.subr.bf16.mxu0 0
    %1289 = vmatpush1.bf16.xpose.msra.mxu0 0
    %1290 = vmatprep.subr.bf16.mxu0 0
    %1291 = vmatpush1.bf16.xpose.msra.mxu0 0
    %1292 = vmatprep.subr.bf16.mxu0 0
    %1293 = vmatpush1.bf16.xpose.msra.mxu0 0
    %1294 = vmatprep.subr.bf16.mxu0 0
    %1295 = vmatpush1.bf16.xpose.msra.mxu0 0
    %1296 = vmatprep.subr.bf16.mxu0 0
    %1297 = vmatpush1.bf16.xpose.msra.mxu0 0
    %1298 = vmatprep.subr.bf16.mxu0 0
    %1299 = vmatpush1.bf16.xpose.msra.mxu0 0
    %1300 = vmatprep.subr.bf16.mxu0 0
    %1301 = vmatpush1.bf16.xpose.msra.mxu0 0
    %1302 = vmatprep.subr.bf16.mxu0 0
    %1303 = vmatpush1.bf16.xpose.msra.mxu0 0
    %1304 = vmatprep.mubr.bf16.mxu0 0
    %1305 = vmatmul.mubr.bf16.gmra.mrb[0].mxu0 %v1267
    %v1306 = vpop.f32.mrb[0].mxu0
    %v1307 = vadd.f32 %v116, %v1306
    %v1308 = vpop.f32.mrb[0].mxu0
    %v1309 = vpop.f32.mrb[0].mxu0
    %v1310 = vpop.f32.mrb[0].mxu0
    %1311 = vdwg.mxu0
    %v1312 = vsel %vm236, %v1307, -inf
    %1313 = vmax.xlane.f32.xlu0 %v1312
    %v1314 = vpop.xlane.xlu0 %1313
    %v1315 = vsub.f32 %v1307, %v1314
    %v1316 = vmul.f32 %v1315, 1.442695
    %v1317 = vpow.pop %v1316
    %v1318 = vsel %vm236, %v1317, 0.0
    %1319 = vadd.xlane.f32.xlu0 %v1318
    %v1320 = vpop.xlane.xlu0 %1319
    %v1321 = vrcp.pop %v1320
    %v1322 = vmul.f32 %v1317, %v1321
    %v1323 = vpack.c.bf16 %v1322, %v1322
    %1324 = vrot.lane.b32.xlu0 %v1263, 64
    %v1325 = vpop.permute.xlu0 %1324
    %v1327 = vsel %vm236, %v1323, 0
    %v1330 = vsel %vm254, %v1325, 0
    %1332 = vmatprep.subr.bf16.mxu0 0
    %1333 = vmatpush1.bf16.msra.mxu0 %v1330
    %1334 = vmatprep.subr.bf16.mxu0 0
    %1335 = vmatpush1.bf16.msra.mxu0 0
    %1336 = vmatprep.subr.bf16.mxu0 0
    %1337 = vmatpush1.bf16.msra.mxu0 0
    %1338 = vmatprep.subr.bf16.mxu0 0
    %1339 = vmatpush1.bf16.msra.mxu0 0
    %1340 = vmatprep.subr.bf16.mxu0 0
    %1341 = vmatpush1.bf16.msra.mxu0 0
    %1342 = vmatprep.subr.bf16.mxu0 0
    %1343 = vmatpush1.bf16.msra.mxu0 0
    %1344 = vmatprep.subr.bf16.mxu0 0
    %1345 = vmatpush1.bf16.msra.mxu0 0
    %1346 = vmatprep.subr.bf16.mxu0 0
    %1347 = vmatpush1.bf16.msra.mxu0 0
    %1348 = vmatprep.subr.bf16.mxu0 0
    %1349 = vmatpush1.bf16.msra.mxu0 0
    %1350 = vmatprep.subr.bf16.mxu0 0
    %1351 = vmatpush1.bf16.msra.mxu0 0
    %1352 = vmatprep.subr.bf16.mxu0 0
    %1353 = vmatpush1.bf16.msra.mxu0 0
    %1354 = vmatprep.subr.bf16.mxu0 0
    %1355 = vmatpush1.bf16.msra.mxu0 0
    %1356 = vmatprep.subr.bf16.mxu0 0
    %1357 = vmatpush1.bf16.msra.mxu0 0
    %1358 = vmatprep.subr.bf16.mxu0 0
    %1359 = vmatpush1.bf16.msra.mxu0 0
    %1360 = vmatprep.subr.bf16.mxu0 0
    %1361 = vmatpush1.bf16.msra.mxu0 0
    %1362 = vmatprep.subr.bf16.mxu0 0
    %1363 = vmatpush1.bf16.msra.mxu0 0
    %1364 = vmatprep.mubr.bf16.mxu0 0
    %1365 = vmatmul.mubr.bf16.gmra.mrb[0].mxu0 %v1327
    %v1366 = vpop.f32.mrb[0].mxu0
    %v1367 = vadd.f32 0.0, %v1366
    %v1368 = vpop.f32.mrb[0].mxu0
    %v1369 = vpop.f32.mrb[0].mxu0
    %v1370 = vpop.f32.mrb[0].mxu0
    %1371 = vdwg.mxu0
    %1372 = vrot.lane.b32.xlu0 %v1263, 112
    %v1373 = vpop.permute.xlu0 %1372
    %1374 = vrot.lane.b32.xlu0 %v1263, 80
    %v1375 = vpop.permute.xlu0 %1374
    %v1377 = vsel %vm189, %v1373, 0
    %v1380 = vsel %vm189, %v1375, 0
    %1382 = vmatprep.subr.bf16.mxu0 0
    %1383 = vmatpush1.bf16.xpose.msra.mxu0 %v1380
    %1384 = vmatprep.subr.bf16.mxu0 0
    %1385 = vmatpush1.bf16.xpose.msra.mxu0 0
    %1386 = vmatprep.subr.bf16.mxu0 0
    %1387 = vmatpush1.bf16.xpose.msra.mxu0 0
    %1388 = vmatprep.subr.bf16.mxu0 0
    %1389 = vmatpush1.bf16.xpose.msra.mxu0 0
    %1390 = vmatprep.subr.bf16.mxu0 0
    %1391 = vmatpush1.bf16.xpose.msra.mxu0 0
    %1392 = vmatprep.subr.bf16.mxu0 0
    %1393 = vmatpush1.bf16.xpose.msra.mxu0 0
    %1394 = vmatprep.subr.bf16.mxu0 0
    %1395 = vmatpush1.bf16.xpose.msra.mxu0 0
    %1396 = vmatprep.subr.bf16.mxu0 0
    %1397 = vmatpush1.bf16.xpose.msra.mxu0 0
    %1398 = vmatprep.subr.bf16.mxu0 0
    %1399 = vmatpush1.bf16.xpose.msra.mxu0 0
    %1400 = vmatprep.subr.bf16.mxu0 0
    %1401 = vmatpush1.bf16.xpose.msra.mxu0 0
    %1402 = vmatprep.subr.bf16.mxu0 0
    %1403 = vmatpush1.bf16.xpose.msra.mxu0 0
    %1404 = vmatprep.subr.bf16.mxu0 0
    %1405 = vmatpush1.bf16.xpose.msra.mxu0 0
    %1406 = vmatprep.subr.bf16.mxu0 0
    %1407 = vmatpush1.bf16.xpose.msra.mxu0 0
    %1408 = vmatprep.subr.bf16.mxu0 0
    %1409 = vmatpush1.bf16.xpose.msra.mxu0 0
    %1410 = vmatprep.subr.bf16.mxu0 0
    %1411 = vmatpush1.bf16.xpose.msra.mxu0 0
    %1412 = vmatprep.subr.bf16.mxu0 0
    %1413 = vmatpush1.bf16.xpose.msra.mxu0 0
    %1414 = vmatprep.mubr.bf16.mxu0 0
    %1415 = vmatmul.mubr.bf16.gmra.mrb[0].mxu0 %v1377
    %v1416 = vpop.f32.mrb[0].mxu0
    %v1417 = vadd.f32 %v116, %v1416
    %v1418 = vpop.f32.mrb[0].mxu0
    %v1419 = vpop.f32.mrb[0].mxu0
    %v1420 = vpop.f32.mrb[0].mxu0
    %1421 = vdwg.mxu0
    %v1422 = vsel %vm236, %v1417, -inf
    %1423 = vmax.xlane.f32.xlu0 %v1422
    %v1424 = vpop.xlane.xlu0 %1423
    %v1425 = vsub.f32 %v1417, %v1424
    %v1426 = vmul.f32 %v1425, 1.442695
    %v1427 = vpow.pop %v1426
    %v1428 = vsel %vm236, %v1427, 0.0
    %1429 = vadd.xlane.f32.xlu0 %v1428
    %v1430 = vpop.xlane.xlu0 %1429
    %v1431 = vrcp.pop %v1430
    %v1432 = vmul.f32 %v1427, %v1431
    %v1433 = vpack.c.bf16 %v1432, %v1432
    %1434 = vrot.lane.b32.xlu0 %v1263, 48
    %v1435 = vpop.permute.xlu0 %1434
    %v1437 = vsel %vm236, %v1433, 0
    %v1440 = vsel %vm254, %v1435, 0
    %1442 = vmatprep.subr.bf16.mxu0 0
    %1443 = vmatpush1.bf16.msra.mxu0 %v1440
    %1444 = vmatprep.subr.bf16.mxu0 0
    %1445 = vmatpush1.bf16.msra.mxu0 0
    %1446 = vmatprep.subr.bf16.mxu0 0
    %1447 = vmatpush1.bf16.msra.mxu0 0
    %1448 = vmatprep.subr.bf16.mxu0 0
    %1449 = vmatpush1.bf16.msra.mxu0 0
    %1450 = vmatprep.subr.bf16.mxu0 0
    %1451 = vmatpush1.bf16.msra.mxu0 0
    %1452 = vmatprep.subr.bf16.mxu0 0
    %1453 = vmatpush1.bf16.msra.mxu0 0
    %1454 = vmatprep.subr.bf16.mxu0 0
    %1455 = vmatpush1.bf16.msra.mxu0 0
    %1456 = vmatprep.subr.bf16.mxu0 0
    %1457 = vmatpush1.bf16.msra.mxu0 0
    %1458 = vmatprep.subr.bf16.mxu0 0
    %1459 = vmatpush1.bf16.msra.mxu0 0
    %1460 = vmatprep.subr.bf16.mxu0 0
    %1461 = vmatpush1.bf16.msra.mxu0 0
    %1462 = vmatprep.subr.bf16.mxu0 0
    %1463 = vmatpush1.bf16.msra.mxu0 0
    %1464 = vmatprep.subr.bf16.mxu0 0
    %1465 = vmatpush1.bf16.msra.mxu0 0
    %1466 = vmatprep.subr.bf16.mxu0 0
    %1467 = vmatpush1.bf16.msra.mxu0 0
    %1468 = vmatprep.subr.bf16.mxu0 0
    %1469 = vmatpush1.bf16.msra.mxu0 0
    %1470 = vmatprep.subr.bf16.mxu0 0
    %1471 = vmatpush1.bf16.msra.mxu0 0
    %1472 = vmatprep.subr.bf16.mxu0 0
    %1473 = vmatpush1.bf16.msra.mxu0 0
    %1474 = vmatprep.mubr.bf16.mxu0 0
    %1475 = vmatmul.mubr.bf16.gmra.mrb[0].mxu0 %v1437
    %v1476 = vpop.f32.mrb[0].mxu0
    %v1477 = vadd.f32 0.0, %v1476
    %v1478 = vpop.f32.mrb[0].mxu0
    %v1479 = vpop.f32.mrb[0].mxu0
    %v1480 = vpop.f32.mrb[0].mxu0
    %1481 = vdwg.mxu0
    %1483 = vrot.lane.b32.xlu0 %v1477, 16
    %v1484 = vpop.permute.xlu0 %1483
    %v1486 = vsel %vm189, %v1367, %v1484
    %v1487 = vpack.c.bf16 %v1486, %v1262
    %s1488 = scalar_lea.vmem %s6, 16
    %v1489 = vld [vmem:[%s1488] sm:$0xf]
    %v1490 = vld [vmem:[%s1488 + $0x4] sm:$0xf]
    %v1491 = vld [vmem:[%s1488 + $0x8] sm:$0xf]
    %v1492 = vld [vmem:[%s1488 + $0xc] sm:$0xf]
    %s1493 = scalar_lea.vmem %s7, 1
    %v1494 = vld [vmem:[%s1493] sm:$0x1]
    %v1496 = vlaneseq
    %v1497 = vshrl.u32 %v1496, 7
    %v1498 = vsub.s32 0, %v1497
    %v1499 = vrot.slane %v1494, %v1498
    %v1505 = vunpack.c.l.b16 %v1489
    %v1506 = vunpack.c.l.b16 %v1490
    %v1507 = vunpack.c.l.b16 %v1491
    %v1508 = vunpack.c.l.b16 %v1492
    %v1509 = vpack.c.b16 %v1506, %v1505
    %v1510 = vpack.c.b16 %v1508, %v1507
    %v1514 = vsel %vm71, %v1487, 0
    %1516 = vmatprep.subr.bf16.mxu0 0
    %1517 = vmatpush1.bf16.msra.mxu0 %v1509
    %1518 = vmatprep.subr.bf16.mxu0 0
    %1519 = vmatpush1.bf16.msra.mxu0 %v1510
    %1520 = vmatprep.subr.bf16.mxu0 0
    %1521 = vmatpush1.bf16.msra.mxu0 0
    %1522 = vmatprep.subr.bf16.mxu0 0
    %1523 = vmatpush1.bf16.msra.mxu0 0
    %1524 = vmatprep.subr.bf16.mxu0 0
    %1525 = vmatpush1.bf16.msra.mxu0 0
    %1526 = vmatprep.subr.bf16.mxu0 0
    %1527 = vmatpush1.bf16.msra.mxu0 0
    %1528 = vmatprep.subr.bf16.mxu0 0
    %1529 = vmatpush1.bf16.msra.mxu0 0
    %1530 = vmatprep.subr.bf16.mxu0 0
    %1531 = vmatpush1.bf16.msra.mxu0 0
    %1532 = vmatprep.subr.bf16.mxu0 0
    %1533 = vmatpush1.bf16.msra.mxu0 0
    %1534 = vmatprep.subr.bf16.mxu0 0
    %1535 = vmatpush1.bf16.msra.mxu0 0
    %1536 = vmatprep.subr.bf16.mxu0 0
    %1537 = vmatpush1.bf16.msra.mxu0 0
    %1538 = vmatprep.subr.bf16.mxu0 0
    %1539 = vmatpush1.bf16.msra.mxu0 0
    %1540 = vmatprep.subr.bf16.mxu0 0
    %1541 = vmatpush1.bf16.msra.mxu0 0
    %1542 = vmatprep.subr.bf16.mxu0 0
    %1543 = vmatpush1.bf16.msra.mxu0 0
    %1544 = vmatprep.subr.bf16.mxu0 0
    %1545 = vmatpush1.bf16.msra.mxu0 0
    %1546 = vmatprep.subr.bf16.mxu0 0
    %1547 = vmatpush1.bf16.msra.mxu0 0
    %1548 = vmatprep.mubr.bf16.mxu0 0
    %1549 = vmatmul.mubr.bf16.gmra.mrb[0].mxu0 %v1514
    %v1550 = vpop.f32.mrb[0].mxu0
    %v1551 = vadd.f32 %v1499, %v1550
    %v1552 = vpop.f32.mrb[0].mxu0
    %v1553 = vpop.f32.mrb[0].mxu0
    %v1554 = vadd.f32 %v1499, %v1553
    %v1555 = vpop.f32.mrb[0].mxu0
    %1556 = vdwg.mxu0
    %v1557 = vadd.f32 %v1551, %v966
    %v1558 = vadd.f32 %v1554, %v967
    %s1559 = scalar_lea.vmem %s8, 1
    %v1560 = vld [vmem:[%s1559] sm:$0x1]
    %s1561 = scalar_lea.vmem %s9, 1
    %v1562 = vld [vmem:[%s1561] sm:$0x1]
    %v1563 = vsel %vm71, %v1557, 0.0
    %1564 = vadd.xlane.f32.xlu0 %v1563
    %v1565 = vpop.xlane.xlu0 %1564
    %v1566 = vsel %vm71, %v1558, 0.0
    %1567 = vadd.xlane.f32.xlu0 %v1566
    %v1568 = vpop.xlane.xlu0 %1567
    %v1569 = vmul.f32 %v1565, %v78
    %v1570 = vmul.f32 %v1568, %v78
    %v1571 = vsub.f32 %v1557, %v1569
    %v1572 = vsub.f32 %v1558, %v1570
    %v1573 = vmul.f32 %v1571, %v1571
    %v1574 = vmul.f32 %v1572, %v1572
    %v1575 = vsel %vm71, %v1573, 0.0
    %1576 = vadd.xlane.f32.xlu0 %v1575
    %v1577 = vpop.xlane.xlu0 %1576
    %v1578 = vsel %vm71, %v1574, 0.0
    %1579 = vadd.xlane.f32.xlu0 %v1578
    %v1580 = vpop.xlane.xlu0 %1579
    %v1581 = vmul.f32 %v1577, %v78
    %v1582 = vmul.f32 %v1580, %v78
    %v1583 = vadd.f32 %v1581, 1e-12
    %v1584 = vadd.f32 %v1582, 1e-12
    %v1585 = vrsqrt.pop %v1583
    %v1586 = vrsqrt.pop %v1584
    %v1587 = vmul.f32 %v1571, %v1585
    %v1588 = vmul.f32 %v1572, %v1586
    %v1590 = vlaneseq
    %v1591 = vshrl.u32 %v1590, 7
    %v1592 = vsub.s32 0, %v1591
    %v1593 = vrot.slane %v1560, %v1592
    %v1595 = vmul.f32 %v1587, %v1593
    %v1596 = vmul.f32 %v1588, %v1593
    %v1598 = vlaneseq
    %v1599 = vshrl.u32 %v1598, 7
    %v1600 = vsub.s32 0, %v1599
    %v1601 = vrot.slane %v1562, %v1600
    %v1603 = vadd.f32 %v1595, %v1601
    %v1604 = vadd.f32 %v1596, %v1601
    %v1605 = vpack.c.bf16 %v1604, %v1603
    %s1606 = scalar_lea.vmem %s10, 16
    %v1607 = vld [vmem:[%s1606] sm:$0xf]
    %v1608 = vld [vmem:[%s1606 + $0x4] sm:$0xf]
    %v1609 = vld [vmem:[%s1606 + $0x8] sm:$0xf]
    %v1610 = vld [vmem:[%s1606 + $0xc] sm:$0xf]
    %s1611 = scalar_lea.vmem %s11, 1
    %v1612 = vld [vmem:[%s1611] sm:$0x1]
    %v1614 = vlaneseq
    %v1615 = vshrl.u32 %v1614, 7
    %v1616 = vsub.s32 0, %v1615
    %v1617 = vrot.slane %v1612, %v1616
    %v1623 = vunpack.c.l.b16 %v1607
    %v1624 = vunpack.c.l.b16 %v1608
    %v1625 = vunpack.c.l.b16 %v1609
    %v1626 = vunpack.c.l.b16 %v1610
    %v1627 = vpack.c.b16 %v1624, %v1623
    %v1628 = vpack.c.b16 %v1626, %v1625
    %v1632 = vsel %vm71, %v1605, 0
    %1634 = vmatprep.subr.bf16.mxu0 0
    %1635 = vmatpush1.bf16.msra.mxu0 %v1627
    %1636 = vmatprep.subr.bf16.mxu0 0
    %1637 = vmatpush1.bf16.msra.mxu0 %v1628
    %1638 = vmatprep.subr.bf16.mxu0 0
    %1639 = vmatpush1.bf16.msra.mxu0 0
    %1640 = vmatprep.subr.bf16.mxu0 0
    %1641 = vmatpush1.bf16.msra.mxu0 0
    %1642 = vmatprep.subr.bf16.mxu0 0
    %1643 = vmatpush1.bf16.msra.mxu0 0
    %1644 = vmatprep.subr.bf16.mxu0 0
    %1645 = vmatpush1.bf16.msra.mxu0 0
    %1646 = vmatprep.subr.bf16.mxu0 0
    %1647 = vmatpush1.bf16.msra.mxu0 0
    %1648 = vmatprep.subr.bf16.mxu0 0
    %1649 = vmatpush1.bf16.msra.mxu0 0
    %1650 = vmatprep.subr.bf16.mxu0 0
    %1651 = vmatpush1.bf16.msra.mxu0 0
    %1652 = vmatprep.subr.bf16.mxu0 0
    %1653 = vmatpush1.bf16.msra.mxu0 0
    %1654 = vmatprep.subr.bf16.mxu0 0
    %1655 = vmatpush1.bf16.msra.mxu0 0
    %1656 = vmatprep.subr.bf16.mxu0 0
    %1657 = vmatpush1.bf16.msra.mxu0 0
    %1658 = vmatprep.subr.bf16.mxu0 0
    %1659 = vmatpush1.bf16.msra.mxu0 0
    %1660 = vmatprep.subr.bf16.mxu0 0
    %1661 = vmatpush1.bf16.msra.mxu0 0
    %1662 = vmatprep.subr.bf16.mxu0 0
    %1663 = vmatpush1.bf16.msra.mxu0 0
    %1664 = vmatprep.subr.bf16.mxu0 0
    %1665 = vmatpush1.bf16.msra.mxu0 0
    %1666 = vmatprep.mubr.bf16.mxu0 0
    %1667 = vmatmul.mubr.bf16.gmra.mrb[0].mxu0 %v1632
    %v1668 = vpop.f32.mrb[0].mxu0
    %v1669 = vadd.f32 %v1617, %v1668
    %v1670 = vpop.f32.mrb[0].mxu0
    %v1671 = vpop.f32.mrb[0].mxu0
    %v1672 = vadd.f32 %v1617, %v1671
    %v1673 = vpop.f32.mrb[0].mxu0
    %1674 = vdwg.mxu0
    %v1675 = vmul.f32 %v1669, %v1669
    %v1676 = vmul.f32 %v1672, %v1672
    %v1677 = vmul.f32 %v1669, %v1675
    %v1678 = vmul.f32 %v1672, %v1676
    %v1679 = vmul.f32 %v1677, 0.044715
    %v1680 = vmul.f32 %v1678, 0.044715
    %v1681 = vadd.f32 %v1669, %v1679
    %v1682 = vadd.f32 %v1672, %v1680
    %v1683 = vmul.f32 %v1681, 0.7978846
    %v1684 = vmul.f32 %v1682, 0.7978846
    %v1685 = vtanh.pop %v1683
    %v1686 = vtanh.pop %v1684
    %v1687 = vadd.f32 %v1685, 1.0
    %v1688 = vadd.f32 %v1686, 1.0
    %v1689 = vmul.f32 %v1687, 0.5
    %v1690 = vmul.f32 %v1688, 0.5
    %v1691 = vmul.f32 %v1669, %v1689
    %v1692 = vmul.f32 %v1672, %v1690
    %v1693 = vpack.c.bf16 %v1692, %v1691
    %s1694 = scalar_lea.vmem %s12, 32
    %v1695 = vld [vmem:[%s1694] sm:$0xf]
    %v1696 = vld [vmem:[%s1694 + $0x4] sm:$0xf]
    %v1697 = vld [vmem:[%s1694 + $0x8] sm:$0xf]
    %v1698 = vld [vmem:[%s1694 + $0xc] sm:$0xf]
    %v1699 = vld [vmem:[%s1694 + $0x10] sm:$0xf]
    %v1700 = vld [vmem:[%s1694 + $0x14] sm:$0xf]
    %v1701 = vld [vmem:[%s1694 + $0x18] sm:$0xf]
    %v1702 = vld [vmem:[%s1694 + $0x1c] sm:$0xf]
    %s1703 = scalar_lea.vmem %s13, 1
    %v1704 = vld [vmem:[%s1703] sm:$0x1]
    %v1706 = vlaneseq
    %v1707 = vshrl.u32 %v1706, 7
    %v1708 = vsub.s32 0, %v1707
    %v1709 = vrot.slane %v1704, %v1708
    %v1719 = vunpack.c.l.b16 %v1695
    %v1720 = vunpack.c.l.b16 %v1696
    %v1721 = vunpack.c.l.b16 %v1697
    %v1722 = vunpack.c.l.b16 %v1698
    %v1723 = vunpack.c.l.b16 %v1699
    %v1724 = vunpack.c.l.b16 %v1700
    %v1725 = vunpack.c.l.b16 %v1701
    %v1726 = vunpack.c.l.b16 %v1702
    %v1727 = vpack.c.b16 %v1720, %v1719
    %v1728 = vpack.c.b16 %v1722, %v1721
    %v1729 = vpack.c.b16 %v1724, %v1723
    %v1730 = vpack.c.b16 %v1726, %v1725
    %v1736 = vsel %vm877, %v1693, 0
    %1738 = vmatprep.subr.bf16.mxu0 0
    %1739 = vmatpush1.bf16.msra.mxu0 %v1727
    %1740 = vmatprep.subr.bf16.mxu0 0
    %1741 = vmatpush1.bf16.msra.mxu0 %v1728
    %1742 = vmatprep.subr.bf16.mxu0 0
    %1743 = vmatpush1.bf16.msra.mxu0 %v1729
    %1744 = vmatprep.subr.bf16.mxu0 0
    %1745 = vmatpush1.bf16.msra.mxu0 %v1730
    %1746 = vmatprep.subr.bf16.mxu0 0
    %1747 = vmatpush1.bf16.msra.mxu0 0
    %1748 = vmatprep.subr.bf16.mxu0 0
    %1749 = vmatpush1.bf16.msra.mxu0 0
    %1750 = vmatprep.subr.bf16.mxu0 0
    %1751 = vmatpush1.bf16.msra.mxu0 0
    %1752 = vmatprep.subr.bf16.mxu0 0
    %1753 = vmatpush1.bf16.msra.mxu0 0
    %1754 = vmatprep.subr.bf16.mxu0 0
    %1755 = vmatpush1.bf16.msra.mxu0 0
    %1756 = vmatprep.subr.bf16.mxu0 0
    %1757 = vmatpush1.bf16.msra.mxu0 0
    %1758 = vmatprep.subr.bf16.mxu0 0
    %1759 = vmatpush1.bf16.msra.mxu0 0
    %1760 = vmatprep.subr.bf16.mxu0 0
    %1761 = vmatpush1.bf16.msra.mxu0 0
    %1762 = vmatprep.subr.bf16.mxu0 0
    %1763 = vmatpush1.bf16.msra.mxu0 0
    %1764 = vmatprep.subr.bf16.mxu0 0
    %1765 = vmatpush1.bf16.msra.mxu0 0
    %1766 = vmatprep.subr.bf16.mxu0 0
    %1767 = vmatpush1.bf16.msra.mxu0 0
    %1768 = vmatprep.subr.bf16.mxu0 0
    %1769 = vmatpush1.bf16.msra.mxu0 0
    %1770 = vmatprep.mubr.bf16.mxu0 0
    %1771 = vmatmul.mubr.bf16.gmra.mrb[0].mxu0 %v1736
    %v1772 = vpop.f32.mrb[0].mxu0
    %v1773 = vadd.f32 %v1709, %v1772
    %v1774 = vpop.f32.mrb[0].mxu0
    %v1775 = vpop.f32.mrb[0].mxu0
    %v1776 = vadd.f32 %v1709, %v1775
    %v1777 = vpop.f32.mrb[0].mxu0
    %1778 = vdwg.mxu0
    %v1779 = vadd.f32 %v1773, %v1603
    %v1780 = vadd.f32 %v1776, %v1604
    %s1781 = scalar_lea.vmem %s14, 1
    %v1782 = vld [vmem:[%s1781] sm:$0x1]
    %s1783 = scalar_lea.vmem %s15, 1
    %v1784 = vld [vmem:[%s1783] sm:$0x1]
    %v1785 = vsel %vm71, %v1779, 0.0
    %1786 = vadd.xlane.f32.xlu0 %v1785
    %v1787 = vpop.xlane.xlu0 %1786
    %v1788 = vsel %vm71, %v1780, 0.0
    %1789 = vadd.xlane.f32.xlu0 %v1788
    %v1790 = vpop.xlane.xlu0 %1789
    %v1791 = vmul.f32 %v1787, %v78
    %v1792 = vmul.f32 %v1790, %v78
    %v1793 = vsub.f32 %v1779, %v1791
    %v1794 = vsub.f32 %v1780, %v1792
    %v1795 = vmul.f32 %v1793, %v1793
    %v1796 = vmul.f32 %v1794, %v1794
    %v1797 = vsel %vm71, %v1795, 0.0
    %1798 = vadd.xlane.f32.xlu0 %v1797
    %v1799 = vpop.xlane.xlu0 %1798
    %v1800 = vsel %vm71, %v1796, 0.0
    %1801 = vadd.xlane.f32.xlu0 %v1800
    %v1802 = vpop.xlane.xlu0 %1801
    %v1803 = vmul.f32 %v1799, %v78
    %v1804 = vmul.f32 %v1802, %v78
    %v1805 = vadd.f32 %v1803, 1e-12
    %v1806 = vadd.f32 %v1804, 1e-12
    %v1807 = vrsqrt.pop %v1805
    %v1808 = vrsqrt.pop %v1806
    %v1809 = vmul.f32 %v1793, %v1807
    %v1810 = vmul.f32 %v1794, %v1808
    %v1812 = vlaneseq
    %v1813 = vshrl.u32 %v1812, 7
    %v1814 = vsub.s32 0, %v1813
    %v1815 = vrot.slane %v1782, %v1814
    %v1817 = vmul.f32 %v1809, %v1815
    %v1818 = vmul.f32 %v1810, %v1815
    %v1820 = vlaneseq
    %v1821 = vshrl.u32 %v1820, 7
    %v1822 = vsub.s32 0, %v1821
    %v1823 = vrot.slane %v1784, %v1822
    %v1825 = vadd.f32 %v1817, %v1823
    %v1826 = vadd.f32 %v1818, %v1823
    %v1828 = vrot.slane %v1826, 7
    %vm1830 = vcmask 1040384
    %v1831 = vsel %vm1830, %v1825, %v1828
    %v1832 = vpack.c.bf16 %v1831, %v1831
    %v1833 = vld [vmem:[%s16] sm:$0xf]
    %v1834 = vld [vmem:[%s16 + $0x4] sm:$0xf]
    %v1835 = vld [vmem:[%s16 + $0x8] sm:$0xf]
    %v1836 = vld [vmem:[%s16 + $0xc] sm:$0xf]
    %v1837 = vld [vmem:[%s17] sm:$0x1]
    %v1839 = vlaneseq
    %v1840 = vshrl.u32 %v1839, 7
    %v1841 = vsub.s32 0, %v1840
    %v1842 = vrot.slane %v1837, %v1841
    %v1848 = vunpack.c.l.b16 %v1833
    %v1849 = vunpack.c.l.b16 %v1834
    %v1850 = vunpack.c.l.b16 %v1835
    %v1851 = vunpack.c.l.b16 %v1836
    %v1852 = vpack.c.b16 %v1849, %v1848
    %v1853 = vpack.c.b16 %v1851, %v1850
    %v1857 = vsel %vm71, %v1832, 0
    %1859 = vmatprep.subr.bf16.mxu0 0
    %1860 = vmatpush1.bf16.msra.mxu0 %v1852
    %1861 = vmatprep.subr.bf16.mxu0 0
    %1862 = vmatpush1.bf16.msra.mxu0 %v1853
    %1863 = vmatprep.subr.bf16.mxu0 0
    %1864 = vmatpush1.bf16.msra.mxu0 0
    %1865 = vmatprep.subr.bf16.mxu0 0
    %1866 = vmatpush1.bf16.msra.mxu0 0
    %1867 = vmatprep.subr.bf16.mxu0 0
    %1868 = vmatpush1.bf16.msra.mxu0 0
    %1869 = vmatprep.subr.bf16.mxu0 0
    %1870 = vmatpush1.bf16.msra.mxu0 0
    %1871 = vmatprep.subr.bf16.mxu0 0
    %1872 = vmatpush1.bf16.msra.mxu0 0
    %1873 = vmatprep.subr.bf16.mxu0 0
    %1874 = vmatpush1.bf16.msra.mxu0 0
    %1875 = vmatprep.subr.bf16.mxu0 0
    %1876 = vmatpush1.bf16.msra.mxu0 0
    %1877 = vmatprep.subr.bf16.mxu0 0
    %1878 = vmatpush1.bf16.msra.mxu0 0
    %1879 = vmatprep.subr.bf16.mxu0 0
    %1880 = vmatpush1.bf16.msra.mxu0 0
    %1881 = vmatprep.subr.bf16.mxu0 0
    %1882 = vmatpush1.bf16.msra.mxu0 0
    %1883 = vmatprep.subr.bf16.mxu0 0
    %1884 = vmatpush1.bf16.msra.mxu0 0
    %1885 = vmatprep.subr.bf16.mxu0 0
    %1886 = vmatpush1.bf16.msra.mxu0 0
    %1887 = vmatprep.subr.bf16.mxu0 0
    %1888 = vmatpush1.bf16.msra.mxu0 0
    %1889 = vmatprep.subr.bf16.mxu0 0
    %1890 = vmatpush1.bf16.msra.mxu0 0
    %1891 = vmatprep.mubr.bf16.mxu0 0
    %1892 = vmatmul.mubr.bf16.gmra.mrb[0].mxu0 %v1857
    %v1893 = vpop.f32.mrb[0].mxu0
    %v1894 = vadd.f32 %v1842, %v1893
    %v1895 = vpop.f32.mrb[0].mxu0
    %v1896 = vpop.f32.mrb[0].mxu0
    %v1897 = vpop.f32.mrb[0].mxu0
    %1898 = vdwg.mxu0
    %v1899 = vtanh.pop %v1894
    %v1900 = vpack.c.bf16 %v1899, %v1899
    %v1901 = vld [vmem:[%s18] sm:$0xf]
    %v1902 = vld [vmem:[%s18 + $0x4] sm:$0xf]
    %v1903 = vld [vmem:[%s18 + $0x8] sm:$0xf]
    %v1904 = vld [vmem:[%s18 + $0xc] sm:$0xf]
    %v1905 = vld [vmem:[%s19] sm:$0x1]
    %v1907 = vlaneseq
    %v1908 = vshrl.u32 %v1907, 7
    %v1909 = vsub.s32 0, %v1908
    %v1910 = vrot.slane %v1905, %v1909
    %v1916 = vunpack.c.l.b16 %v1901
    %v1917 = vunpack.c.l.b16 %v1902
    %v1918 = vunpack.c.l.b16 %v1903
    %v1919 = vunpack.c.l.b16 %v1904
    %v1920 = vpack.c.b16 %v1917, %v1916
    %v1921 = vpack.c.b16 %v1919, %v1918
    %v1925 = vsel %vm71, %v1900, 0
    %1927 = vmatprep.subr.bf16.mxu0 0
    %1928 = vmatpush1.bf16.msra.mxu0 %v1920
    %1929 = vmatprep.subr.bf16.mxu0 0
    %1930 = vmatpush1.bf16.msra.mxu0 %v1921
    %1931 = vmatprep.subr.bf16.mxu0 0
    %1932 = vmatpush1.bf16.msra.mxu0 0
    %1933 = vmatprep.subr.bf16.mxu0 0
    %1934 = vmatpush1.bf16.msra.mxu0 0
    %1935 = vmatprep.subr.bf16.mxu0 0
    %1936 = vmatpush1.bf16.msra.mxu0 0
    %1937 = vmatprep.subr.bf16.mxu0 0
    %1938 = vmatpush1.bf16.msra.mxu0 0
    %1939 = vmatprep.subr.bf16.mxu0 0
    %1940 = vmatpush1.bf16.msra.mxu0 0
    %1941 = vmatprep.subr.bf16.mxu0 0
    %1942 = vmatpush1.bf16.msra.mxu0 0
    %1943 = vmatprep.subr.bf16.mxu0 0
    %1944 = vmatpush1.bf16.msra.mxu0 0
    %1945 = vmatprep.subr.bf16.mxu0 0
    %1946 = vmatpush1.bf16.msra.mxu0 0
    %1947 = vmatprep.subr.bf16.mxu0 0
    %1948 = vmatpush1.bf16.msra.mxu0 0
    %1949 = vmatprep.subr.bf16.mxu0 0
    %1950 = vmatpush1.bf16.msra.mxu0 0
    %1951 = vmatprep.subr.bf16.mxu0 0
    %1952 = vmatpush1.bf16.msra.mxu0 0
    %1953 = vmatprep.subr.bf16.mxu0 0
    %1954 = vmatpush1.bf16.msra.mxu0 0
    %1955 = vmatprep.subr.bf16.mxu0 0
    %1956 = vmatpush1.bf16.msra.mxu0 0
    %1957 = vmatprep.subr.bf16.mxu0 0
    %1958 = vmatpush1.bf16.msra.mxu0 0
    %1959 = vmatprep.mubr.bf16.mxu0 0
    %1960 = vmatmul.mubr.bf16.gmra.mrb[0].mxu0 %v1925
    %v1961 = vpop.f32.mrb[0].mxu0
    %v1962 = vadd.f32 %v1910, %v1961
    %v1963 = vpop.f32.mrb[0].mxu0
    %v1964 = vpop.f32.mrb[0].mxu0
    %v1965 = vpop.f32.mrb[0].mxu0
    %1966 = vdwg.mxu0
    %vm1967 = vcmask 17408
    %1968 = vst.msk [vmem:[#allocation2] sm:$0x3] %vm1967, %v1962
    // Predicated region
    $region82: #{bert_classifier_forward.1} parent=1 // pred_check
      _
    $region83: #{bert_classifier_forward.1} parent=1 // pred_check_branch
      %1970 = sbr.rel (0) target = $region85
    $region84: #{bert_classifier_forward.1} parent=1 // pred_region
      %s1972 = ssub.s32 32, 32
      %1973 = vsyncadd [#allocation3], %s1972
      %s1975 = sshll.u32 [#allocation2], 4
      %s1976 = int_to_ptr.vmem [resolvable:$true] %s1975
      %1978 = dma.vmem_to_hbm [thread:$0]  %s1976, 32, %s20, [#allocation3]
    $region85: #{bert_classifier_forward.1} parent=1 // pred_fallthru
      _
    // Predicated region
    $region86: #{bert_classifier_forward.1} parent=1 // pred_check
      _
    $region87: #{bert_classifier_forward.1} parent=1 // pred_check_branch
      %1980 = sbr.rel (0) target = $region89
    $region88: #{bert_classifier_forward.1} parent=1 // pred_region
      %1981 = dma.done [#allocation3], 32
    $region89: #{bert_classifier_forward.1} parent=1 // pred_fallthru
      _
    %1982 = vsyncpa [#allocation3], 1

</llo_original>
